<compile_context>
chip_gen: v7x
topology: tpu7x:2x2x1
jax: 0.10.0
libtpu: 0.0.40
codegen_flags: <defaults>
</compile_context>

<pallas_src>
import numpy as np
import jax
import jax.numpy as jnp
from jax.experimental import pallas as pl
from jax.experimental.pallas import tpu as pltpu

# ---------------- module hyper-parameters (small, TPU-friendly) -------------
INPUT_CHANNEL = 8          # must be even
HIDDEN        = 32
KSIZE         = 3          # odd, as asserted by WN
DILATION_RATE = 2
N_LAYERS      = 3
INPUT_LENGTH  = 16         # L; torch module implicitly requires a power of two
BATCH         = 2

HALF = INPUT_CHANNEL // 2
L, H, K = INPUT_LENGTH, HIDDEN, KSIZE
ROWS = BATCH * L           # batch folded into the sublane (row) axis
GATE = 2 * H               # tanh | sigmoid gate width

# --- static guards: hyper-parameter changes must not silently break the math.
assert INPUT_CHANNEL % 2 == 0
assert K == 3, "kernel fuses exactly the 3 conv taps (center, +/-dilation)"
assert (L & (L - 1)) == 0 and L > 0, "hierarchy sum requires power-of-two length"
assert DILATION_RATE ** (N_LAYERS - 1) < L, "max dilation must be < sequence length"
assert ROWS % 8 == 0, "rows (B*L) should be sublane-aligned"


# ---------------------------- index-glue matrices ----------------------------
def _build_hier_matrices():
    """E (L, 2L): x1 += E @ cat([s1, s2], axis=len) == the repeat_interleave sum."""
    bit_l = L.bit_length()
    E = np.zeros((L, 2 * L), dtype=np.float32)
    now = 0
    for i in reversed(range(bit_l)):
        m = 1 << i
        r = L // m
        for seg in range(m):
            E[seg * r:(seg + 1) * r, now + seg] = 1.0
        now += m
    return E[:, :L].copy(), E[:, L:].copy()


# --------------------------------- kernel -----------------------------------
def _hierarchy_flow_kernel(x_ref, wpre_ref, bpre_ref,
                           wg1_ref, bg1_ref, wrs1_ref, brs1_ref,
                           wg2_ref, bg2_ref, wrs2_ref, brs2_ref,
                           wp1_ref, bp1_ref, wp2_ref, bp2_ref,
                           e1_ref, e2_ref, out_ref):
    f32 = jnp.float32
    bf16 = jnp.bfloat16

    def mm(a, b):
        # explicit bf16 MXU matmul, f32 accumulation (weights arrive bf16)
        return jnp.dot(a.astype(bf16), b.astype(bf16), preferred_element_type=f32)

    x_full = x_ref[...].astype(f32)              # (ROWS, C)
    x0 = x_full[:, :HALF]                        # (ROWS, HALF)

    # within-sequence position of every row (batch folded into rows); the
    # per-dilation boundary masks are built ONCE and shared by both encoders.
    t_pos = jax.lax.broadcasted_iota(jnp.int32, (ROWS, GATE), 0) % L
    masks = [(t_pos >= DILATION_RATE ** i, t_pos < L - DILATION_RATE ** i)
             for i in range(N_LAYERS)]

    # pre: 1x1 conv -> (ROWS, H)
    s = mm(x0, wpre_ref[...]) + bpre_ref[...]

    def run_wn(x, wg_ref, bg_ref, wrs_ref, brs_ref):
        skip = None
        for i in range(N_LAYERS):
            d = DILATION_RATE ** i
            m_lo, m_hi = masks[i]
            # all K taps and both gate halves in ONE matmul -> (ROWS, K*2H)
            y = mm(x, wg_ref[i])
            # +/- dilation row shifts: XLU sublane rotations + boundary masks
            # (masks also zero any cross-batch wraparound of the rotation).
            y_m = pltpu.roll(y[:, :GATE], shift=d, axis=0)              # y[t-d] tap
            y_p = pltpu.roll(y[:, 2 * GATE:], shift=ROWS - d, axis=0)   # y[t+d] tap
            x_in = (y[:, GATE:2 * GATE]                                 # center tap
                    + jnp.where(m_lo, y_m, 0.0)
                    + jnp.where(m_hi, y_p, 0.0)
                    + bg_ref[i])
            acts = jnp.tanh(x_in[:, :H]) * jax.nn.sigmoid(x_in[:, H:])
            # fused res|skip 1x1 conv (last layer has zero res weights)
            rs = mm(acts, wrs_ref[i]) + brs_ref[i]
            if i < N_LAYERS - 1:
                x = x + rs[:, :H]
            skip = rs[:, H:] if skip is None else skip + rs[:, H:]
        return skip

    s1 = run_wn(s, wg1_ref, bg1_ref, wrs1_ref, brs1_ref)
    s2 = run_wn(s, wg2_ref, bg2_ref, wrs2_ref, brs2_ref)

    # proj / proj2, zero-padded to the full C output lanes (lanes 0:HALF == 0)
    p1 = mm(s1, wp1_ref[...]) + bp1_ref[...]     # (ROWS, C)
    p2 = mm(s2, wp2_ref[...]) + bp2_ref[...]

    # hierarchical repeat_interleave accumulation (reverse=False path),
    # added straight onto the pass-through input: no lane concatenates.
    out = x_full + mm(e1_ref[...], p1) + mm(e2_ref[...], p2)
    out_ref[...] = out.astype(out_ref.dtype)


# --------------------------------- wrapper -----------------------------------
@jax.jit
def hierarchy_flow_forward(x_ncl, kernel_weights):
    """x_ncl: (B, INPUT_CHANNEL, L) float32 -> (B, INPUT_CHANNEL, L)."""
    x_rows = jnp.transpose(x_ncl, (0, 2, 1)).reshape(ROWS, INPUT_CHANNEL)
    out_rows = pl.pallas_call(
        _hierarchy_flow_kernel,
        out_shape=jax.ShapeDtypeStruct((ROWS, INPUT_CHANNEL), jnp.float32),
        input_output_aliases={0: 0},
        compiler_params=pltpu.CompilerParams(
            # let XLA fuse the input transpose into the pallas call launch
            allow_input_fusion=[True] + [False] * len(kernel_weights)),
    )(x_rows, *kernel_weights)
    return jnp.transpose(out_rows.reshape(BATCH, L, INPUT_CHANNEL), (0, 2, 1))


# ------------------------- deterministic parameter init ----------------------
def init_params(key):
    def nrm(k, shape, scale):
        return scale * jax.random.normal(k, shape, dtype=jnp.float32)

    keys = iter(jax.random.split(key, 64))
    p = {}
    p['pre_w'] = nrm(next(keys), (H, HALF, 1), 0.25)         # Conv1d(half, H, 1)
    p['pre_b'] = nrm(next(keys), (H,), 0.1)
    for name in ('enc1', 'enc2'):                            # two WN stacks
        in_w, in_b, rs_w, rs_b = [], [], [], []
        for i in range(N_LAYERS):
            in_w.append(nrm(next(keys), (2 * H, H, K), 0.08))
            in_b.append(nrm(next(keys), (2 * H,), 0.1))
            rs_out = 2 * H if i < N_LAYERS - 1 else H
            rs_w.append(nrm(next(keys), (rs_out, H, 1), 0.1))
            rs_b.append(nrm(next(keys), (rs_out,), 0.05))
        p[name] = dict(in_w=in_w, in_b=in_b, rs_w=rs_w, rs_b=rs_b)
    # NOTE: the PyTorch module zero-initialises proj / proj2; small deterministic
    # random values are used here so the full compute path is exercised.
    p['proj1_w'] = nrm(next(keys), (HALF, H, 1), 0.06)
    p['proj1_b'] = nrm(next(keys), (HALF,), 0.05)
    p['proj2_w'] = nrm(next(keys), (HALF, H, 1), 0.06)
    p['proj2_b'] = nrm(next(keys), (HALF,), 0.05)
    return p


def to_kernel_params(p):
    bf16 = jnp.bfloat16
    wpre = p['pre_w'][:, :, 0].T.astype(bf16)         # (HALF, H)
    bpre = p['pre_b'][None, :]                        # (1, H) f32 (VPU add)

    def wn_pack(wp):
        wg, bg, wrs, brs = [], [], [], []
        for i in range(N_LAYERS):
            # fuse all K taps + both gate halves: (H, K*2H), bf16
            taps = [wp['in_w'][i][:, :, j].T for j in range(K)]   # each (H, 2H)
            wg.append(jnp.concatenate(taps, axis=1).astype(bf16))
            bg.append(wp['in_b'][i][None, :])                     # (1, 2H) f32
            if i < N_LAYERS - 1:
                wrs.append(wp['rs_w'][i][:, :, 0].T.astype(bf16)) # (H, 2H) res|skip
                brs.append(wp['rs_b'][i][None, :])
            else:                                                 # last: skip only
                wrs.append(jnp.concatenate(
                    [jnp.zeros((H, H), jnp.float32),
                     wp['rs_w'][i][:, :, 0].T], axis=1).astype(bf16))
                brs.append(jnp.concatenate(
                    [jnp.zeros((1, H), jnp.float32),
                     wp['rs_b'][i][None, :]], axis=1))
        st = lambda xs: jnp.stack(xs, axis=0)
        return st(wg), st(bg), st(wrs), st(brs)

    enc1 = wn_pack(p['enc1'])
    enc2 = wn_pack(p['enc2'])

    # proj / proj2 zero-padded to all C output lanes (lanes 0:HALF stay zero so
    # the x0 half passes through untouched in the fused output add)
    z_w = jnp.zeros((H, HALF), jnp.float32)
    wp1 = jnp.concatenate([z_w, p['proj1_w'][:, :, 0].T], axis=1).astype(bf16)  # (H, C)
    wp2 = jnp.concatenate([z_w, p['proj2_w'][:, :, 0].T], axis=1).astype(bf16)
    z_b = jnp.zeros((HALF,), jnp.float32)
    bp1 = jnp.concatenate([z_b, p['proj1_b']])[None, :]                          # (1, C)
    bp2 = jnp.concatenate([z_b, p['proj2_b']])[None, :]

    # hierarchy matrices, block-diagonal over the folded batch rows.
    # NOTE: dense kron(I_B, E) is O((B*L)^2); fine at ROWS=32, switch to a
    # per-batch grid (keep E at (L, 2L)) if B*L grows.
    e1, e2 = _build_hier_matrices()
    eye_b = np.eye(BATCH, dtype=np.float32)
    e1f = jnp.asarray(np.kron(eye_b, e1)).astype(bf16)   # (ROWS, ROWS), 0/1 exact
    e2f = jnp.asarray(np.kron(eye_b, e2)).astype(bf16)

    return [wpre, bpre, *enc1, *enc2, wp1, bp1, wp2, bp2, e1f, e2f]


# ----------------------- pure-JAX reference (torch semantics) ----------------
def _conv1d_ncl(x, w, b, dilation=1, padding=0):
    y = jax.lax.conv_general_dilated(
        x, w, window_strides=(1,), padding=[(padding, padding)],
        rhs_dilation=(dilation,), dimension_numbers=('NCH', 'OIH', 'NCH'),
        precision=jax.lax.Precision.HIGHEST)
    return y + b[None, :, None]


def reference_forward(x, p):
    x0, x1 = x[:, :HALF], x[:, HALF:]
    l = x1.shape[2]
    s = _conv1d_ncl(x0, p['pre_w'], p['pre_b'])

    def wn(xin, wp):
        out = jnp.zeros_like(xin)
        xc = xin
        for i in range(N_LAYERS):
            d = DILATION_RATE ** i
            pad = d * (K - 1) // 2
            x_in = _conv1d_ncl(xc, wp['in_w'][i], wp['in_b'][i], d, pad)
            acts = jnp.tanh(x_in[:, :H]) * jax.nn.sigmoid(x_in[:, H:])
            rs = _conv1d_ncl(acts, wp['rs_w'][i], wp['rs_b'][i])
            if i < N_LAYERS - 1:
                xc = xc + rs[:, :H]
                out = out + rs[:, H:]
            else:
                out = out + rs
        return out

    s1 = _conv1d_ncl(wn(s, p['enc1']), p['proj1_w'], p['proj1_b'])
    s2 = _conv1d_ncl(wn(s, p['enc2']), p['proj2_w'], p['proj2_b'])
    scat = jnp.concatenate([s1, s2], axis=2)
    now = 0
    for i in reversed(range(l.bit_length())):
        a = scat[:, :, now:now + (1 << i)]
        now += (1 << i)
        a = jnp.repeat(a, l // (1 << i), axis=2)
        x1 = x1 + a
    return jnp.concatenate([x0, x1], axis=1)


# ----------------------------------- main ------------------------------------
if __name__ == "__main__":
    key = jax.random.PRNGKey(0)
    kx, kp = jax.random.split(key)
    x = jax.random.normal(kx, (BATCH, INPUT_CHANNEL, L), dtype=jnp.float32)

    params = init_params(kp)
    kernel_weights = to_kernel_params(params)

    out = hierarchy_flow_forward(x, kernel_weights)
    out = jax.block_until_ready(out)

    ref = reference_forward(x, params)
    err = float(jnp.max(jnp.abs(out - ref)))
    assert out.shape == (BATCH, INPUT_CHANNEL, L), out.shape
    # tolerance accounts for bf16 MXU matmuls vs. the f32-HIGHEST reference
    assert err < 2e-2, f"max abs error vs reference: {err}"
    print("KERNEL_OK")
</pallas_src>

<mosaic_0001>
module attributes {stable_mosaic.version = 11 : i64} {
  func.func @_hierarchy_flow_kernel(%arg0: memref<32x8xf32, #tpu.memory_space<vmem>>, %arg1: memref<4x32xbf16, #tpu.memory_space<vmem>>, %arg2: memref<1x32xf32, #tpu.memory_space<vmem>>, %arg3: memref<3x32x192xbf16, #tpu.memory_space<vmem>>, %arg4: memref<3x1x64xf32, #tpu.memory_space<vmem>>, %arg5: memref<3x32x64xbf16, #tpu.memory_space<vmem>>, %arg6: memref<3x1x64xf32, #tpu.memory_space<vmem>>, %arg7: memref<3x32x192xbf16, #tpu.memory_space<vmem>>, %arg8: memref<3x1x64xf32, #tpu.memory_space<vmem>>, %arg9: memref<3x32x64xbf16, #tpu.memory_space<vmem>>, %arg10: memref<3x1x64xf32, #tpu.memory_space<vmem>>, %arg11: memref<32x8xbf16, #tpu.memory_space<vmem>>, %arg12: memref<1x8xf32, #tpu.memory_space<vmem>>, %arg13: memref<32x8xbf16, #tpu.memory_space<vmem>>, %arg14: memref<1x8xf32, #tpu.memory_space<vmem>>, %arg15: memref<32x32xbf16, #tpu.memory_space<vmem>>, %arg16: memref<32x32xbf16, #tpu.memory_space<vmem>>, %arg17: memref<32x8xf32, #tpu.memory_space<vmem>>) attributes {dimension_semantics = [], scalar_prefetch = 0 : i64, scratch_operands = 0 : i64, tpu.core_type = #tpu.core_type<tc>} {
    %c0 = arith.constant 0 : index
    %c0_0 = arith.constant 0 : index
    %0 = vector.load %arg0[%c0, %c0_0] : memref<32x8xf32, #tpu.memory_space<vmem>>, vector<32x8xf32>
    %1 = vector.extract_strided_slice %0 {offsets = [0, 0], sizes = [32, 4], strides = [1, 1]} : vector<32x8xf32> to vector<32x4xf32>
    %2 = tpu.iota {dimensions = array<i32: 0>} : vector<32x64xi32>
    %c16_i32 = arith.constant 16 : i32
    %c0_i32 = arith.constant 0 : i32
    %3 = arith.cmpi eq, %c16_i32, %c0_i32 : i32
    %c1_i32 = arith.constant 1 : i32
    %4 = arith.select %3, %c1_i32, %c16_i32 : i32
    %5 = vector.broadcast %4 : i32 to vector<32x64xi32>
    %6 = arith.remsi %2, %5 : vector<32x64xi32>
    %c0_i32_1 = arith.constant 0 : i32
    %7 = vector.broadcast %c0_i32_1 : i32 to vector<32x64xi32>
    %8 = arith.cmpi ne, %6, %7 : vector<32x64xi32>
    %c0_i32_2 = arith.constant 0 : i32
    %9 = vector.broadcast %c0_i32_2 : i32 to vector<32x64xi32>
    %10 = arith.cmpi slt, %6, %9 : vector<32x64xi32>
    %c0_i32_3 = arith.constant 0 : i32
    %11 = arith.cmpi slt, %4, %c0_i32_3 : i32
    %12 = vector.broadcast %11 : i1 to vector<32x64xi1>
    %13 = vector.broadcast %12 : vector<32x64xi1> to vector<32x64xi1>
    %14 = arith.xori %10, %13 : vector<32x64xi1>
    %15 = arith.andi %14, %8 : vector<32x64xi1>
    %16 = vector.broadcast %4 : i32 to vector<32x64xi32>
    %17 = arith.addi %6, %16 : vector<32x64xi32>
    %18 = arith.select %15, %17, %6 : vector<32x64xi1>, vector<32x64xi32>
    %c1_i32_4 = arith.constant 1 : i32
    %19 = vector.broadcast %c1_i32_4 : i32 to vector<32x64xi32>
    %20 = arith.cmpi sge, %18, %19 : vector<32x64xi32>
    %c15_i32 = arith.constant 15 : i32
    %21 = vector.broadcast %c15_i32 : i32 to vector<32x64xi32>
    %22 = arith.cmpi slt, %18, %21 : vector<32x64xi32>
    %c2_i32 = arith.constant 2 : i32
    %23 = vector.broadcast %c2_i32 : i32 to vector<32x64xi32>
    %24 = arith.cmpi sge, %18, %23 : vector<32x64xi32>
    %c14_i32 = arith.constant 14 : i32
    %25 = vector.broadcast %c14_i32 : i32 to vector<32x64xi32>
    %26 = arith.cmpi slt, %18, %25 : vector<32x64xi32>
    %c4_i32 = arith.constant 4 : i32
    %27 = vector.broadcast %c4_i32 : i32 to vector<32x64xi32>
    %28 = arith.cmpi sge, %18, %27 : vector<32x64xi32>
    %c12_i32 = arith.constant 12 : i32
    %29 = vector.broadcast %c12_i32 : i32 to vector<32x64xi32>
    %30 = arith.cmpi slt, %18, %29 : vector<32x64xi32>
    %c0_5 = arith.constant 0 : index
    %c0_6 = arith.constant 0 : index
    %31 = vector.load %arg1[%c0_5, %c0_6] : memref<4x32xbf16, #tpu.memory_space<vmem>>, vector<4x32xbf16>
    %32 = arith.truncf %1 : vector<32x4xf32> to vector<32x4xbf16>
    %cst = arith.constant dense<0.000000e+00> : vector<32x32xf32>
    %33 = tpu.matmul %32, %31, %cst {dimension_numbers = #tpu.dot_dimension_numbers<[1], [0], [0], [1], [0, 0, 1, 1], [], []>} : vector<32x4xbf16>, vector<4x32xbf16>, vector<32x32xf32> -> vector<32x32xf32>
    %c0_7 = arith.constant 0 : index
    %c0_8 = arith.constant 0 : index
    %34 = vector.load %arg2[%c0_7, %c0_8] : memref<1x32xf32, #tpu.memory_space<vmem>>, vector<1x32xf32>
    %35 = vector.broadcast %34 : vector<1x32xf32> to vector<32x32xf32>
    %36 = arith.addf %33, %35 : vector<32x32xf32>
    %c0_9 = arith.constant 0 : index
    %c0_10 = arith.constant 0 : index
    %c0_11 = arith.constant 0 : index
    %37 = vector.load %arg3[%c0_9, %c0_10, %c0_11] : memref<3x32x192xbf16, #tpu.memory_space<vmem>>, vector<1x32x192xbf16>
    %38 = vector.shape_cast %37 : vector<1x32x192xbf16> to vector<32x192xbf16>
    %39 = arith.truncf %36 : vector<32x32xf32> to vector<32x32xbf16>
    %cst_12 = arith.constant dense<0.000000e+00> : vector<32x192xf32>
    %40 = tpu.matmul %39, %38, %cst_12 {dimension_numbers = #tpu.dot_dimension_numbers<[1], [0], [0], [1], [0, 0, 1, 1], [], []>} : vector<32x32xbf16>, vector<32x192xbf16>, vector<32x192xf32> -> vector<32x192xf32>
    %41 = vector.extract_strided_slice %40 {offsets = [0, 0], sizes = [32, 64], strides = [1, 1]} : vector<32x192xf32> to vector<32x64xf32>
    %c1_i32_13 = arith.constant 1 : i32
    %42 = tpu.dynamic_rotate %41 by %c1_i32_13 dim 0 : vector<32x64xf32>, i32 -> vector<32x64xf32>
    %43 = vector.extract_strided_slice %40 {offsets = [0, 128], sizes = [32, 64], strides = [1, 1]} : vector<32x192xf32> to vector<32x64xf32>
    %c31_i32 = arith.constant 31 : i32
    %44 = tpu.dynamic_rotate %43 by %c31_i32 dim 0 : vector<32x64xf32>, i32 -> vector<32x64xf32>
    %45 = vector.extract_strided_slice %40 {offsets = [0, 64], sizes = [32, 64], strides = [1, 1]} : vector<32x192xf32> to vector<32x64xf32>
    %cst_14 = arith.constant 0.000000e+00 : f32
    %46 = vector.broadcast %cst_14 : f32 to vector<32x64xf32>
    %47 = arith.select %20, %42, %46 : vector<32x64xi1>, vector<32x64xf32>
    %48 = arith.addf %45, %47 : vector<32x64xf32>
    %cst_15 = arith.constant 0.000000e+00 : f32
    %49 = vector.broadcast %cst_15 : f32 to vector<32x64xf32>
    %50 = arith.select %22, %44, %49 : vector<32x64xi1>, vector<32x64xf32>
    %51 = arith.addf %48, %50 : vector<32x64xf32>
    %c0_16 = arith.constant 0 : index
    %c0_17 = arith.constant 0 : index
    %c0_18 = arith.constant 0 : index
    %52 = vector.load %arg4[%c0_16, %c0_17, %c0_18] : memref<3x1x64xf32, #tpu.memory_space<vmem>>, vector<1x1x64xf32>
    %53 = vector.shape_cast %52 : vector<1x1x64xf32> to vector<1x64xf32>
    %54 = vector.broadcast %53 : vector<1x64xf32> to vector<32x64xf32>
    %55 = arith.addf %51, %54 : vector<32x64xf32>
    %56 = vector.extract_strided_slice %55 {offsets = [0, 0], sizes = [32, 32], strides = [1, 1]} : vector<32x64xf32> to vector<32x32xf32>
    %57 = math.tanh %56 : vector<32x32xf32>
    %58 = vector.extract_strided_slice %55 {offsets = [0, 32], sizes = [32, 32], strides = [1, 1]} : vector<32x64xf32> to vector<32x32xf32>
    %59 = arith.negf %58 : vector<32x32xf32>
    %60 = math.exp %59 : vector<32x32xf32>
    %cst_19 = arith.constant 1.000000e+00 : f32
    %61 = vector.broadcast %cst_19 : f32 to vector<32x32xf32>
    %62 = arith.addf %61, %60 : vector<32x32xf32>
    %63 = arith.divf %61, %62 : vector<32x32xf32>
    %64 = arith.mulf %57, %63 : vector<32x32xf32>
    %c0_20 = arith.constant 0 : index
    %c0_21 = arith.constant 0 : index
    %c0_22 = arith.constant 0 : index
    %65 = vector.load %arg5[%c0_20, %c0_21, %c0_22] : memref<3x32x64xbf16, #tpu.memory_space<vmem>>, vector<1x32x64xbf16>
    %66 = vector.shape_cast %65 : vector<1x32x64xbf16> to vector<32x64xbf16>
    %67 = arith.truncf %64 : vector<32x32xf32> to vector<32x32xbf16>
    %cst_23 = arith.constant dense<0.000000e+00> : vector<32x64xf32>
    %68 = tpu.matmul %67, %66, %cst_23 {dimension_numbers = #tpu.dot_dimension_numbers<[1], [0], [0], [1], [0, 0, 1, 1], [], []>} : vector<32x32xbf16>, vector<32x64xbf16>, vector<32x64xf32> -> vector<32x64xf32>
    %c0_24 = arith.constant 0 : index
    %c0_25 = arith.constant 0 : index
    %c0_26 = arith.constant 0 : index
    %69 = vector.load %arg6[%c0_24, %c0_25, %c0_26] : memref<3x1x64xf32, #tpu.memory_space<vmem>>, vector<1x1x64xf32>
    %70 = vector.shape_cast %69 : vector<1x1x64xf32> to vector<1x64xf32>
    %71 = vector.broadcast %70 : vector<1x64xf32> to vector<32x64xf32>
    %72 = arith.addf %68, %71 : vector<32x64xf32>
    %73 = vector.extract_strided_slice %72 {offsets = [0, 0], sizes = [32, 32], strides = [1, 1]} : vector<32x64xf32> to vector<32x32xf32>
    %74 = arith.addf %36, %73 : vector<32x32xf32>
    %75 = vector.extract_strided_slice %72 {offsets = [0, 32], sizes = [32, 32], strides = [1, 1]} : vector<32x64xf32> to vector<32x32xf32>
    %c1 = arith.constant 1 : index
    %c0_27 = arith.constant 0 : index
    %c0_28 = arith.constant 0 : index
    %76 = vector.load %arg3[%c1, %c0_27, %c0_28] : memref<3x32x192xbf16, #tpu.memory_space<vmem>>, vector<1x32x192xbf16>
    %77 = vector.shape_cast %76 : vector<1x32x192xbf16> to vector<32x192xbf16>
    %78 = arith.truncf %74 : vector<32x32xf32> to vector<32x32xbf16>
    %cst_29 = arith.constant dense<0.000000e+00> : vector<32x192xf32>
    %79 = tpu.matmul %78, %77, %cst_29 {dimension_numbers = #tpu.dot_dimension_numbers<[1], [0], [0], [1], [0, 0, 1, 1], [], []>} : vector<32x32xbf16>, vector<32x192xbf16>, vector<32x192xf32> -> vector<32x192xf32>
    %80 = vector.extract_strided_slice %79 {offsets = [0, 0], sizes = [32, 64], strides = [1, 1]} : vector<32x192xf32> to vector<32x64xf32>
    %c2_i32_30 = arith.constant 2 : i32
    %81 = tpu.dynamic_rotate %80 by %c2_i32_30 dim 0 : vector<32x64xf32>, i32 -> vector<32x64xf32>
    %82 = vector.extract_strided_slice %79 {offsets = [0, 128], sizes = [32, 64], strides = [1, 1]} : vector<32x192xf32> to vector<32x64xf32>
    %c30_i32 = arith.constant 30 : i32
    %83 = tpu.dynamic_rotate %82 by %c30_i32 dim 0 : vector<32x64xf32>, i32 -> vector<32x64xf32>
    %84 = vector.extract_strided_slice %79 {offsets = [0, 64], sizes = [32, 64], strides = [1, 1]} : vector<32x192xf32> to vector<32x64xf32>
    %cst_31 = arith.constant 0.000000e+00 : f32
    %85 = vector.broadcast %cst_31 : f32 to vector<32x64xf32>
    %86 = arith.select %24, %81, %85 : vector<32x64xi1>, vector<32x64xf32>
    %87 = arith.addf %84, %86 : vector<32x64xf32>
    %cst_32 = arith.constant 0.000000e+00 : f32
    %88 = vector.broadcast %cst_32 : f32 to vector<32x64xf32>
    %89 = arith.select %26, %83, %88 : vector<32x64xi1>, vector<32x64xf32>
    %90 = arith.addf %87, %89 : vector<32x64xf32>
    %c1_33 = arith.constant 1 : index
    %c0_34 = arith.constant 0 : index
    %c0_35 = arith.constant 0 : index
    %91 = vector.load %arg4[%c1_33, %c0_34, %c0_35] : memref<3x1x64xf32, #tpu.memory_space<vmem>>, vector<1x1x64xf32>
    %92 = vector.shape_cast %91 : vector<1x1x64xf32> to vector<1x64xf32>
    %93 = vector.broadcast %92 : vector<1x64xf32> to vector<32x64xf32>
    %94 = arith.addf %90, %93 : vector<32x64xf32>
    %95 = vector.extract_strided_slice %94 {offsets = [0, 0], sizes = [32, 32], strides = [1, 1]} : vector<32x64xf32> to vector<32x32xf32>
    %96 = math.tanh %95 : vector<32x32xf32>
    %97 = vector.extract_strided_slice %94 {offsets = [0, 32], sizes = [32, 32], strides = [1, 1]} : vector<32x64xf32> to vector<32x32xf32>
    %98 = arith.negf %97 : vector<32x32xf32>
    %99 = math.exp %98 : vector<32x32xf32>
    %cst_36 = arith.constant 1.000000e+00 : f32
    %100 = vector.broadcast %cst_36 : f32 to vector<32x32xf32>
    %101 = arith.addf %100, %99 : vector<32x32xf32>
    %102 = arith.divf %100, %101 : vector<32x32xf32>
    %103 = arith.mulf %96, %102 : vector<32x32xf32>
    %c1_37 = arith.constant 1 : index
    %c0_38 = arith.constant 0 : index
    %c0_39 = arith.constant 0 : index
    %104 = vector.load %arg5[%c1_37, %c0_38, %c0_39] : memref<3x32x64xbf16, #tpu.memory_space<vmem>>, vector<1x32x64xbf16>
    %105 = vector.shape_cast %104 : vector<1x32x64xbf16> to vector<32x64xbf16>
    %106 = arith.truncf %103 : vector<32x32xf32> to vector<32x32xbf16>
    %cst_40 = arith.constant dense<0.000000e+00> : vector<32x64xf32>
    %107 = tpu.matmul %106, %105, %cst_40 {dimension_numbers = #tpu.dot_dimension_numbers<[1], [0], [0], [1], [0, 0, 1, 1], [], []>} : vector<32x32xbf16>, vector<32x64xbf16>, vector<32x64xf32> -> vector<32x64xf32>
    %c1_41 = arith.constant 1 : index
    %c0_42 = arith.constant 0 : index
    %c0_43 = arith.constant 0 : index
    %108 = vector.load %arg6[%c1_41, %c0_42, %c0_43] : memref<3x1x64xf32, #tpu.memory_space<vmem>>, vector<1x1x64xf32>
    %109 = vector.shape_cast %108 : vector<1x1x64xf32> to vector<1x64xf32>
    %110 = vector.broadcast %109 : vector<1x64xf32> to vector<32x64xf32>
    %111 = arith.addf %107, %110 : vector<32x64xf32>
    %112 = vector.extract_strided_slice %111 {offsets = [0, 0], sizes = [32, 32], strides = [1, 1]} : vector<32x64xf32> to vector<32x32xf32>
    %113 = arith.addf %74, %112 : vector<32x32xf32>
    %114 = vector.extract_strided_slice %111 {offsets = [0, 32], sizes = [32, 32], strides = [1, 1]} : vector<32x64xf32> to vector<32x32xf32>
    %115 = arith.addf %75, %114 : vector<32x32xf32>
    %c2 = arith.constant 2 : index
    %c0_44 = arith.constant 0 : index
    %c0_45 = arith.constant 0 : index
    %116 = vector.load %arg3[%c2, %c0_44, %c0_45] : memref<3x32x192xbf16, #tpu.memory_space<vmem>>, vector<1x32x192xbf16>
    %117 = vector.shape_cast %116 : vector<1x32x192xbf16> to vector<32x192xbf16>
    %118 = arith.truncf %113 : vector<32x32xf32> to vector<32x32xbf16>
    %cst_46 = arith.constant dense<0.000000e+00> : vector<32x192xf32>
    %119 = tpu.matmul %118, %117, %cst_46 {dimension_numbers = #tpu.dot_dimension_numbers<[1], [0], [0], [1], [0, 0, 1, 1], [], []>} : vector<32x32xbf16>, vector<32x192xbf16>, vector<32x192xf32> -> vector<32x192xf32>
    %120 = vector.extract_strided_slice %119 {offsets = [0, 0], sizes = [32, 64], strides = [1, 1]} : vector<32x192xf32> to vector<32x64xf32>
    %c4_i32_47 = arith.constant 4 : i32
    %121 = tpu.dynamic_rotate %120 by %c4_i32_47 dim 0 : vector<32x64xf32>, i32 -> vector<32x64xf32>
    %122 = vector.extract_strided_slice %119 {offsets = [0, 128], sizes = [32, 64], strides = [1, 1]} : vector<32x192xf32> to vector<32x64xf32>
    %c28_i32 = arith.constant 28 : i32
    %123 = tpu.dynamic_rotate %122 by %c28_i32 dim 0 : vector<32x64xf32>, i32 -> vector<32x64xf32>
    %124 = vector.extract_strided_slice %119 {offsets = [0, 64], sizes = [32, 64], strides = [1, 1]} : vector<32x192xf32> to vector<32x64xf32>
    %cst_48 = arith.constant 0.000000e+00 : f32
    %125 = vector.broadcast %cst_48 : f32 to vector<32x64xf32>
    %126 = arith.select %28, %121, %125 : vector<32x64xi1>, vector<32x64xf32>
    %127 = arith.addf %124, %126 : vector<32x64xf32>
    %cst_49 = arith.constant 0.000000e+00 : f32
    %128 = vector.broadcast %cst_49 : f32 to vector<32x64xf32>
    %129 = arith.select %30, %123, %128 : vector<32x64xi1>, vector<32x64xf32>
    %130 = arith.addf %127, %129 : vector<32x64xf32>
    %c2_50 = arith.constant 2 : index
    %c0_51 = arith.constant 0 : index
    %c0_52 = arith.constant 0 : index
    %131 = vector.load %arg4[%c2_50, %c0_51, %c0_52] : memref<3x1x64xf32, #tpu.memory_space<vmem>>, vector<1x1x64xf32>
    %132 = vector.shape_cast %131 : vector<1x1x64xf32> to vector<1x64xf32>
    %133 = vector.broadcast %132 : vector<1x64xf32> to vector<32x64xf32>
    %134 = arith.addf %130, %133 : vector<32x64xf32>
    %135 = vector.extract_strided_slice %134 {offsets = [0, 0], sizes = [32, 32], strides = [1, 1]} : vector<32x64xf32> to vector<32x32xf32>
    %136 = math.tanh %135 : vector<32x32xf32>
    %137 = vector.extract_strided_slice %134 {offsets = [0, 32], sizes = [32, 32], strides = [1, 1]} : vector<32x64xf32> to vector<32x32xf32>
    %138 = arith.negf %137 : vector<32x32xf32>
    %139 = math.exp %138 : vector<32x32xf32>
    %cst_53 = arith.constant 1.000000e+00 : f32
    %140 = vector.broadcast %cst_53 : f32 to vector<32x32xf32>
    %141 = arith.addf %140, %139 : vector<32x32xf32>
    %142 = arith.divf %140, %141 : vector<32x32xf32>
    %143 = arith.mulf %136, %142 : vector<32x32xf32>
    %c2_54 = arith.constant 2 : index
    %c0_55 = arith.constant 0 : index
    %c0_56 = arith.constant 0 : index
    %144 = vector.load %arg5[%c2_54, %c0_55, %c0_56] : memref<3x32x64xbf16, #tpu.memory_space<vmem>>, vector<1x32x64xbf16>
    %145 = vector.shape_cast %144 : vector<1x32x64xbf16> to vector<32x64xbf16>
    %146 = arith.truncf %143 : vector<32x32xf32> to vector<32x32xbf16>
    %cst_57 = arith.constant dense<0.000000e+00> : vector<32x64xf32>
    %147 = tpu.matmul %146, %145, %cst_57 {dimension_numbers = #tpu.dot_dimension_numbers<[1], [0], [0], [1], [0, 0, 1, 1], [], []>} : vector<32x32xbf16>, vector<32x64xbf16>, vector<32x64xf32> -> vector<32x64xf32>
    %c2_58 = arith.constant 2 : index
    %c0_59 = arith.constant 0 : index
    %c0_60 = arith.constant 0 : index
    %148 = vector.load %arg6[%c2_58, %c0_59, %c0_60] : memref<3x1x64xf32, #tpu.memory_space<vmem>>, vector<1x1x64xf32>
    %149 = vector.shape_cast %148 : vector<1x1x64xf32> to vector<1x64xf32>
    %150 = vector.broadcast %149 : vector<1x64xf32> to vector<32x64xf32>
    %151 = arith.addf %147, %150 : vector<32x64xf32>
    %152 = vector.extract_strided_slice %151 {offsets = [0, 32], sizes = [32, 32], strides = [1, 1]} : vector<32x64xf32> to vector<32x32xf32>
    %153 = arith.addf %115, %152 : vector<32x32xf32>
    %c0_61 = arith.constant 0 : index
    %c0_62 = arith.constant 0 : index
    %c0_63 = arith.constant 0 : index
    %154 = vector.load %arg7[%c0_61, %c0_62, %c0_63] : memref<3x32x192xbf16, #tpu.memory_space<vmem>>, vector<1x32x192xbf16>
    %155 = vector.shape_cast %154 : vector<1x32x192xbf16> to vector<32x192xbf16>
    %156 = arith.truncf %36 : vector<32x32xf32> to vector<32x32xbf16>
    %cst_64 = arith.constant dense<0.000000e+00> : vector<32x192xf32>
    %157 = tpu.matmul %156, %155, %cst_64 {dimension_numbers = #tpu.dot_dimension_numbers<[1], [0], [0], [1], [0, 0, 1, 1], [], []>} : vector<32x32xbf16>, vector<32x192xbf16>, vector<32x192xf32> -> vector<32x192xf32>
    %158 = vector.extract_strided_slice %157 {offsets = [0, 0], sizes = [32, 64], strides = [1, 1]} : vector<32x192xf32> to vector<32x64xf32>
    %c1_i32_65 = arith.constant 1 : i32
    %159 = tpu.dynamic_rotate %158 by %c1_i32_65 dim 0 : vector<32x64xf32>, i32 -> vector<32x64xf32>
    %160 = vector.extract_strided_slice %157 {offsets = [0, 128], sizes = [32, 64], strides = [1, 1]} : vector<32x192xf32> to vector<32x64xf32>
    %c31_i32_66 = arith.constant 31 : i32
    %161 = tpu.dynamic_rotate %160 by %c31_i32_66 dim 0 : vector<32x64xf32>, i32 -> vector<32x64xf32>
    %162 = vector.extract_strided_slice %157 {offsets = [0, 64], sizes = [32, 64], strides = [1, 1]} : vector<32x192xf32> to vector<32x64xf32>
    %cst_67 = arith.constant 0.000000e+00 : f32
    %163 = vector.broadcast %cst_67 : f32 to vector<32x64xf32>
    %164 = arith.select %20, %159, %163 : vector<32x64xi1>, vector<32x64xf32>
    %165 = arith.addf %162, %164 : vector<32x64xf32>
    %cst_68 = arith.constant 0.000000e+00 : f32
    %166 = vector.broadcast %cst_68 : f32 to vector<32x64xf32>
    %167 = arith.select %22, %161, %166 : vector<32x64xi1>, vector<32x64xf32>
    %168 = arith.addf %165, %167 : vector<32x64xf32>
    %c0_69 = arith.constant 0 : index
    %c0_70 = arith.constant 0 : index
    %c0_71 = arith.constant 0 : index
    %169 = vector.load %arg8[%c0_69, %c0_70, %c0_71] : memref<3x1x64xf32, #tpu.memory_space<vmem>>, vector<1x1x64xf32>
    %170 = vector.shape_cast %169 : vector<1x1x64xf32> to vector<1x64xf32>
    %171 = vector.broadcast %170 : vector<1x64xf32> to vector<32x64xf32>
    %172 = arith.addf %168, %171 : vector<32x64xf32>
    %173 = vector.extract_strided_slice %172 {offsets = [0, 0], sizes = [32, 32], strides = [1, 1]} : vector<32x64xf32> to vector<32x32xf32>
    %174 = math.tanh %173 : vector<32x32xf32>
    %175 = vector.extract_strided_slice %172 {offsets = [0, 32], sizes = [32, 32], strides = [1, 1]} : vector<32x64xf32> to vector<32x32xf32>
    %176 = arith.negf %175 : vector<32x32xf32>
    %177 = math.exp %176 : vector<32x32xf32>
    %cst_72 = arith.constant 1.000000e+00 : f32
    %178 = vector.broadcast %cst_72 : f32 to vector<32x32xf32>
    %179 = arith.addf %178, %177 : vector<32x32xf32>
    %180 = arith.divf %178, %179 : vector<32x32xf32>
    %181 = arith.mulf %174, %180 : vector<32x32xf32>
    %c0_73 = arith.constant 0 : index
    %c0_74 = arith.constant 0 : index
    %c0_75 = arith.constant 0 : index
    %182 = vector.load %arg9[%c0_73, %c0_74, %c0_75] : memref<3x32x64xbf16, #tpu.memory_space<vmem>>, vector<1x32x64xbf16>
    %183 = vector.shape_cast %182 : vector<1x32x64xbf16> to vector<32x64xbf16>
    %184 = arith.truncf %181 : vector<32x32xf32> to vector<32x32xbf16>
    %cst_76 = arith.constant dense<0.000000e+00> : vector<32x64xf32>
    %185 = tpu.matmul %184, %183, %cst_76 {dimension_numbers = #tpu.dot_dimension_numbers<[1], [0], [0], [1], [0, 0, 1, 1], [], []>} : vector<32x32xbf16>, vector<32x64xbf16>, vector<32x64xf32> -> vector<32x64xf32>
    %c0_77 = arith.constant 0 : index
    %c0_78 = arith.constant 0 : index
    %c0_79 = arith.constant 0 : index
    %186 = vector.load %arg10[%c0_77, %c0_78, %c0_79] : memref<3x1x64xf32, #tpu.memory_space<vmem>>, vector<1x1x64xf32>
    %187 = vector.shape_cast %186 : vector<1x1x64xf32> to vector<1x64xf32>
    %188 = vector.broadcast %187 : vector<1x64xf32> to vector<32x64xf32>
    %189 = arith.addf %185, %188 : vector<32x64xf32>
    %190 = vector.extract_strided_slice %189 {offsets = [0, 0], sizes = [32, 32], strides = [1, 1]} : vector<32x64xf32> to vector<32x32xf32>
    %191 = arith.addf %36, %190 : vector<32x32xf32>
    %192 = vector.extract_strided_slice %189 {offsets = [0, 32], sizes = [32, 32], strides = [1, 1]} : vector<32x64xf32> to vector<32x32xf32>
    %c1_80 = arith.constant 1 : index
    %c0_81 = arith.constant 0 : index
    %c0_82 = arith.constant 0 : index
    %193 = vector.load %arg7[%c1_80, %c0_81, %c0_82] : memref<3x32x192xbf16, #tpu.memory_space<vmem>>, vector<1x32x192xbf16>
    %194 = vector.shape_cast %193 : vector<1x32x192xbf16> to vector<32x192xbf16>
    %195 = arith.truncf %191 : vector<32x32xf32> to vector<32x32xbf16>
    %cst_83 = arith.constant dense<0.000000e+00> : vector<32x192xf32>
    %196 = tpu.matmul %195, %194, %cst_83 {dimension_numbers = #tpu.dot_dimension_numbers<[1], [0], [0], [1], [0, 0, 1, 1], [], []>} : vector<32x32xbf16>, vector<32x192xbf16>, vector<32x192xf32> -> vector<32x192xf32>
    %197 = vector.extract_strided_slice %196 {offsets = [0, 0], sizes = [32, 64], strides = [1, 1]} : vector<32x192xf32> to vector<32x64xf32>
    %c2_i32_84 = arith.constant 2 : i32
    %198 = tpu.dynamic_rotate %197 by %c2_i32_84 dim 0 : vector<32x64xf32>, i32 -> vector<32x64xf32>
    %199 = vector.extract_strided_slice %196 {offsets = [0, 128], sizes = [32, 64], strides = [1, 1]} : vector<32x192xf32> to vector<32x64xf32>
    %c30_i32_85 = arith.constant 30 : i32
    %200 = tpu.dynamic_rotate %199 by %c30_i32_85 dim 0 : vector<32x64xf32>, i32 -> vector<32x64xf32>
    %201 = vector.extract_strided_slice %196 {offsets = [0, 64], sizes = [32, 64], strides = [1, 1]} : vector<32x192xf32> to vector<32x64xf32>
    %cst_86 = arith.constant 0.000000e+00 : f32
    %202 = vector.broadcast %cst_86 : f32 to vector<32x64xf32>
    %203 = arith.select %24, %198, %202 : vector<32x64xi1>, vector<32x64xf32>
    %204 = arith.addf %201, %203 : vector<32x64xf32>
    %cst_87 = arith.constant 0.000000e+00 : f32
    %205 = vector.broadcast %cst_87 : f32 to vector<32x64xf32>
    %206 = arith.select %26, %200, %205 : vector<32x64xi1>, vector<32x64xf32>
    %207 = arith.addf %204, %206 : vector<32x64xf32>
    %c1_88 = arith.constant 1 : index
    %c0_89 = arith.constant 0 : index
    %c0_90 = arith.constant 0 : index
    %208 = vector.load %arg8[%c1_88, %c0_89, %c0_90] : memref<3x1x64xf32, #tpu.memory_space<vmem>>, vector<1x1x64xf32>
    %209 = vector.shape_cast %208 : vector<1x1x64xf32> to vector<1x64xf32>
    %210 = vector.broadcast %209 : vector<1x64xf32> to vector<32x64xf32>
    %211 = arith.addf %207, %210 : vector<32x64xf32>
    %212 = vector.extract_strided_slice %211 {offsets = [0, 0], sizes = [32, 32], strides = [1, 1]} : vector<32x64xf32> to vector<32x32xf32>
    %213 = math.tanh %212 : vector<32x32xf32>
    %214 = vector.extract_strided_slice %211 {offsets = [0, 32], sizes = [32, 32], strides = [1, 1]} : vector<32x64xf32> to vector<32x32xf32>
    %215 = arith.negf %214 : vector<32x32xf32>
    %216 = math.exp %215 : vector<32x32xf32>
    %cst_91 = arith.constant 1.000000e+00 : f32
    %217 = vector.broadcast %cst_91 : f32 to vector<32x32xf32>
    %218 = arith.addf %217, %216 : vector<32x32xf32>
    %219 = arith.divf %217, %218 : vector<32x32xf32>
    %220 = arith.mulf %213, %219 : vector<32x32xf32>
    %c1_92 = arith.constant 1 : index
    %c0_93 = arith.constant 0 : index
    %c0_94 = arith.constant 0 : index
    %221 = vector.load %arg9[%c1_92, %c0_93, %c0_94] : memref<3x32x64xbf16, #tpu.memory_space<vmem>>, vector<1x32x64xbf16>
    %222 = vector.shape_cast %221 : vector<1x32x64xbf16> to vector<32x64xbf16>
    %223 = arith.truncf %220 : vector<32x32xf32> to vector<32x32xbf16>
    %cst_95 = arith.constant dense<0.000000e+00> : vector<32x64xf32>
    %224 = tpu.matmul %223, %222, %cst_95 {dimension_numbers = #tpu.dot_dimension_numbers<[1], [0], [0], [1], [0, 0, 1, 1], [], []>} : vector<32x32xbf16>, vector<32x64xbf16>, vector<32x64xf32> -> vector<32x64xf32>
    %c1_96 = arith.constant 1 : index
    %c0_97 = arith.constant 0 : index
    %c0_98 = arith.constant 0 : index
    %225 = vector.load %arg10[%c1_96, %c0_97, %c0_98] : memref<3x1x64xf32, #tpu.memory_space<vmem>>, vector<1x1x64xf32>
    %226 = vector.shape_cast %225 : vector<1x1x64xf32> to vector<1x64xf32>
    %227 = vector.broadcast %226 : vector<1x64xf32> to vector<32x64xf32>
    %228 = arith.addf %224, %227 : vector<32x64xf32>
    %229 = vector.extract_strided_slice %228 {offsets = [0, 0], sizes = [32, 32], strides = [1, 1]} : vector<32x64xf32> to vector<32x32xf32>
    %230 = arith.addf %191, %229 : vector<32x32xf32>
    %231 = vector.extract_strided_slice %228 {offsets = [0, 32], sizes = [32, 32], strides = [1, 1]} : vector<32x64xf32> to vector<32x32xf32>
    %232 = arith.addf %192, %231 : vector<32x32xf32>
    %c2_99 = arith.constant 2 : index
    %c0_100 = arith.constant 0 : index
    %c0_101 = arith.constant 0 : index
    %233 = vector.load %arg7[%c2_99, %c0_100, %c0_101] : memref<3x32x192xbf16, #tpu.memory_space<vmem>>, vector<1x32x192xbf16>
    %234 = vector.shape_cast %233 : vector<1x32x192xbf16> to vector<32x192xbf16>
    %235 = arith.truncf %230 : vector<32x32xf32> to vector<32x32xbf16>
    %cst_102 = arith.constant dense<0.000000e+00> : vector<32x192xf32>
    %236 = tpu.matmul %235, %234, %cst_102 {dimension_numbers = #tpu.dot_dimension_numbers<[1], [0], [0], [1], [0, 0, 1, 1], [], []>} : vector<32x32xbf16>, vector<32x192xbf16>, vector<32x192xf32> -> vector<32x192xf32>
    %237 = vector.extract_strided_slice %236 {offsets = [0, 0], sizes = [32, 64], strides = [1, 1]} : vector<32x192xf32> to vector<32x64xf32>
    %c4_i32_103 = arith.constant 4 : i32
    %238 = tpu.dynamic_rotate %237 by %c4_i32_103 dim 0 : vector<32x64xf32>, i32 -> vector<32x64xf32>
    %239 = vector.extract_strided_slice %236 {offsets = [0, 128], sizes = [32, 64], strides = [1, 1]} : vector<32x192xf32> to vector<32x64xf32>
    %c28_i32_104 = arith.constant 28 : i32
    %240 = tpu.dynamic_rotate %239 by %c28_i32_104 dim 0 : vector<32x64xf32>, i32 -> vector<32x64xf32>
    %241 = vector.extract_strided_slice %236 {offsets = [0, 64], sizes = [32, 64], strides = [1, 1]} : vector<32x192xf32> to vector<32x64xf32>
    %cst_105 = arith.constant 0.000000e+00 : f32
    %242 = vector.broadcast %cst_105 : f32 to vector<32x64xf32>
    %243 = arith.select %28, %238, %242 : vector<32x64xi1>, vector<32x64xf32>
    %244 = arith.addf %241, %243 : vector<32x64xf32>
    %cst_106 = arith.constant 0.000000e+00 : f32
    %245 = vector.broadcast %cst_106 : f32 to vector<32x64xf32>
    %246 = arith.select %30, %240, %245 : vector<32x64xi1>, vector<32x64xf32>
    %247 = arith.addf %244, %246 : vector<32x64xf32>
    %c2_107 = arith.constant 2 : index
    %c0_108 = arith.constant 0 : index
    %c0_109 = arith.constant 0 : index
    %248 = vector.load %arg8[%c2_107, %c0_108, %c0_109] : memref<3x1x64xf32, #tpu.memory_space<vmem>>, vector<1x1x64xf32>
    %249 = vector.shape_cast %248 : vector<1x1x64xf32> to vector<1x64xf32>
    %250 = vector.broadcast %249 : vector<1x64xf32> to vector<32x64xf32>
    %251 = arith.addf %247, %250 : vector<32x64xf32>
    %252 = vector.extract_strided_slice %251 {offsets = [0, 0], sizes = [32, 32], strides = [1, 1]} : vector<32x64xf32> to vector<32x32xf32>
    %253 = math.tanh %252 : vector<32x32xf32>
    %254 = vector.extract_strided_slice %251 {offsets = [0, 32], sizes = [32, 32], strides = [1, 1]} : vector<32x64xf32> to vector<32x32xf32>
    %255 = arith.negf %254 : vector<32x32xf32>
    %256 = math.exp %255 : vector<32x32xf32>
    %cst_110 = arith.constant 1.000000e+00 : f32
    %257 = vector.broadcast %cst_110 : f32 to vector<32x32xf32>
    %258 = arith.addf %257, %256 : vector<32x32xf32>
    %259 = arith.divf %257, %258 : vector<32x32xf32>
    %260 = arith.mulf %253, %259 : vector<32x32xf32>
    %c2_111 = arith.constant 2 : index
    %c0_112 = arith.constant 0 : index
    %c0_113 = arith.constant 0 : index
    %261 = vector.load %arg9[%c2_111, %c0_112, %c0_113] : memref<3x32x64xbf16, #tpu.memory_space<vmem>>, vector<1x32x64xbf16>
    %262 = vector.shape_cast %261 : vector<1x32x64xbf16> to vector<32x64xbf16>
    %263 = arith.truncf %260 : vector<32x32xf32> to vector<32x32xbf16>
    %cst_114 = arith.constant dense<0.000000e+00> : vector<32x64xf32>
    %264 = tpu.matmul %263, %262, %cst_114 {dimension_numbers = #tpu.dot_dimension_numbers<[1], [0], [0], [1], [0, 0, 1, 1], [], []>} : vector<32x32xbf16>, vector<32x64xbf16>, vector<32x64xf32> -> vector<32x64xf32>
    %c2_115 = arith.constant 2 : index
    %c0_116 = arith.constant 0 : index
    %c0_117 = arith.constant 0 : index
    %265 = vector.load %arg10[%c2_115, %c0_116, %c0_117] : memref<3x1x64xf32, #tpu.memory_space<vmem>>, vector<1x1x64xf32>
    %266 = vector.shape_cast %265 : vector<1x1x64xf32> to vector<1x64xf32>
    %267 = vector.broadcast %266 : vector<1x64xf32> to vector<32x64xf32>
    %268 = arith.addf %264, %267 : vector<32x64xf32>
    %269 = vector.extract_strided_slice %268 {offsets = [0, 32], sizes = [32, 32], strides = [1, 1]} : vector<32x64xf32> to vector<32x32xf32>
    %270 = arith.addf %232, %269 : vector<32x32xf32>
    %c0_118 = arith.constant 0 : index
    %c0_119 = arith.constant 0 : index
    %271 = vector.load %arg11[%c0_118, %c0_119] : memref<32x8xbf16, #tpu.memory_space<vmem>>, vector<32x8xbf16>
    %272 = arith.truncf %153 : vector<32x32xf32> to vector<32x32xbf16>
    %cst_120 = arith.constant dense<0.000000e+00> : vector<32x8xf32>
    %273 = tpu.matmul %272, %271, %cst_120 {dimension_numbers = #tpu.dot_dimension_numbers<[1], [0], [0], [1], [0, 0, 1, 1], [], []>} : vector<32x32xbf16>, vector<32x8xbf16>, vector<32x8xf32> -> vector<32x8xf32>
    %c0_121 = arith.constant 0 : index
    %c0_122 = arith.constant 0 : index
    %274 = vector.load %arg12[%c0_121, %c0_122] : memref<1x8xf32, #tpu.memory_space<vmem>>, vector<1x8xf32>
    %275 = vector.broadcast %274 : vector<1x8xf32> to vector<32x8xf32>
    %276 = arith.addf %273, %275 : vector<32x8xf32>
    %c0_123 = arith.constant 0 : index
    %c0_124 = arith.constant 0 : index
    %277 = vector.load %arg13[%c0_123, %c0_124] : memref<32x8xbf16, #tpu.memory_space<vmem>>, vector<32x8xbf16>
    %278 = arith.truncf %270 : vector<32x32xf32> to vector<32x32xbf16>
    %cst_125 = arith.constant dense<0.000000e+00> : vector<32x8xf32>
    %279 = tpu.matmul %278, %277, %cst_125 {dimension_numbers = #tpu.dot_dimension_numbers<[1], [0], [0], [1], [0, 0, 1, 1], [], []>} : vector<32x32xbf16>, vector<32x8xbf16>, vector<32x8xf32> -> vector<32x8xf32>
    %c0_126 = arith.constant 0 : index
    %c0_127 = arith.constant 0 : index
    %280 = vector.load %arg14[%c0_126, %c0_127] : memref<1x8xf32, #tpu.memory_space<vmem>>, vector<1x8xf32>
    %281 = vector.broadcast %280 : vector<1x8xf32> to vector<32x8xf32>
    %282 = arith.addf %279, %281 : vector<32x8xf32>
    %c0_128 = arith.constant 0 : index
    %c0_129 = arith.constant 0 : index
    %283 = vector.load %arg15[%c0_128, %c0_129] : memref<32x32xbf16, #tpu.memory_space<vmem>>, vector<32x32xbf16>
    %284 = arith.truncf %276 : vector<32x8xf32> to vector<32x8xbf16>
    %cst_130 = arith.constant dense<0.000000e+00> : vector<32x8xf32>
    %285 = tpu.matmul %283, %284, %cst_130 {dimension_numbers = #tpu.dot_dimension_numbers<[1], [0], [0], [1], [0, 0, 1, 1], [], []>} : vector<32x32xbf16>, vector<32x8xbf16>, vector<32x8xf32> -> vector<32x8xf32>
    %286 = arith.addf %0, %285 : vector<32x8xf32>
    %c0_131 = arith.constant 0 : index
    %c0_132 = arith.constant 0 : index
    %287 = vector.load %arg16[%c0_131, %c0_132] : memref<32x32xbf16, #tpu.memory_space<vmem>>, vector<32x32xbf16>
    %288 = arith.truncf %282 : vector<32x8xf32> to vector<32x8xbf16>
    %cst_133 = arith.constant dense<0.000000e+00> : vector<32x8xf32>
    %289 = tpu.matmul %287, %288, %cst_133 {dimension_numbers = #tpu.dot_dimension_numbers<[1], [0], [0], [1], [0, 0, 1, 1], [], []>} : vector<32x32xbf16>, vector<32x8xbf16>, vector<32x8xf32> -> vector<32x8xf32>
    %290 = arith.addf %286, %289 : vector<32x8xf32>
    %c0_134 = arith.constant 0 : index
    %c0_135 = arith.constant 0 : index
    %291 = vector.load %arg17[%c0_134, %c0_135] : memref<32x8xf32, #tpu.memory_space<vmem>>, vector<32x8xf32>
    tpu.vector_store %arg17[%c0_134, %c0_135], %290 {strides = array<i32>} : memref<32x8xf32, #tpu.memory_space<vmem>>, vector<32x8xf32>,
    return
  }
}

</mosaic_0001>

<llo_original>
// kernel: hierarchy_flow_forward.1
$region0: #{hierarchy_flow_forward.1}
  #allocation0 [shape = 'u32[]', space=smem, size = 0x4, offset = 0x4, fixed_abs, tag = 'smem constant byte address 0x4 - core index']
  #allocation1 [shape = 'u32[144,128]{1,0:T(1,128)}', space=vmem, size = 0x12000, scoped, tag = 'internal scratch']
  %s0 = inlined_call_operand.vmem [shape: f32[32,8], index: 0, kind: input, shape index: {}, may-alias: {0,17}]
  %s1 = inlined_call_operand.hbm [shape: bf16[4,32], index: 1, kind: input, shape index: {}]
  %s2 = inlined_call_operand.vmem [shape: f32[1,32], index: 2, kind: input, shape index: {}]
  %s3 = inlined_call_operand.vmem [shape: bf16[3,32,192], index: 3, kind: input, shape index: {}]
  %s4 = inlined_call_operand.hbm [shape: f32[3,1,64], index: 4, kind: input, shape index: {}]
  %s5 = inlined_call_operand.hbm [shape: bf16[3,32,64], index: 5, kind: input, shape index: {}]
  %s6 = inlined_call_operand.hbm [shape: f32[3,1,64], index: 6, kind: input, shape index: {}]
  %s7 = inlined_call_operand.hbm [shape: bf16[3,32,192], index: 7, kind: input, shape index: {}]
  %s8 = inlined_call_operand.hbm [shape: f32[3,1,64], index: 8, kind: input, shape index: {}]
  %s9 = inlined_call_operand.hbm [shape: bf16[3,32,64], index: 9, kind: input, shape index: {}]
  %s10 = inlined_call_operand.hbm [shape: f32[3,1,64], index: 10, kind: input, shape index: {}]
  %s11 = inlined_call_operand.vmem [shape: bf16[32,8], index: 11, kind: input, shape index: {}]
  %s12 = inlined_call_operand.vmem [shape: f32[1,8], index: 12, kind: input, shape index: {}]
  %s13 = inlined_call_operand.vmem [shape: bf16[32,8], index: 13, kind: input, shape index: {}]
  %s14 = inlined_call_operand.vmem [shape: f32[1,8], index: 14, kind: input, shape index: {}]
  %s15 = inlined_call_operand.vmem [shape: bf16[32,32], index: 15, kind: input, shape index: {}]
  %s16 = inlined_call_operand.vmem [shape: bf16[32,32], index: 16, kind: input, shape index: {}]
  %s17 = inlined_call_operand.vmem [shape: f32[32,8], index: 17, kind: output, shape index: {}, may-alias: {0,17}]
  %s18 = sld [smem:[#allocation0]]
  $region110: #{hierarchy_flow_forward.1} parent=0
    _
  %s20 = ssub.s32 1, %s18
  %s21 = scalar_select 0, %s20, %s18
  $region1: #{hierarchy_flow_forward.1} parent=0
    #allocation2 [shape = 'u8[1024]{0}', space=vmem, size = 0x400, scoped, tag = 'input window, operand 1, single buffered']
    #allocation3 [shape = 's32[1]{0}', space=sflag, size = 0x4, scoped, tag = 'scoped memory for hierarchy_flow_forward.1']
    #allocation4 [shape = 'u8[1536]{0}', space=vmem, size = 0x800, scoped, tag = 'input window, operand 4, single buffered']
    #allocation5 [shape = 's32[1]{0}', space=sflag, size = 0x4, scoped, tag = 'scoped memory for hierarchy_flow_forward.1']
    #allocation6 [shape = 'u8[24576]{0}', space=vmem, size = 0x6000, scoped, tag = 'input window, operand 5, single buffered']
    #allocation7 [shape = 'u8[1536]{0}', space=vmem, size = 0x800, scoped, tag = 'input window, operand 6, single buffered']
    #allocation8 [shape = 's32[1]{0}', space=sflag, size = 0x4, scoped, tag = 'scoped memory for hierarchy_flow_forward.1']
    #allocation9 [shape = 'u8[49152]{0}', space=vmem, size = 0xc000, scoped, tag = 'input window, operand 7, single buffered']
    #allocation10 [shape = 'u8[1536]{0}', space=vmem, size = 0x800, scoped, tag = 'input window, operand 8, single buffered']
    #allocation11 [shape = 's32[1]{0}', space=sflag, size = 0x4, scoped, tag = 'scoped memory for hierarchy_flow_forward.1']
    #allocation12 [shape = 'u8[24576]{0}', space=vmem, size = 0x6000, scoped, tag = 'input window, operand 9, single buffered']
    #allocation13 [shape = 'u8[1536]{0}', space=vmem, size = 0x800, scoped, tag = 'input window, operand 10, single buffered']
    #allocation14 [shape = 's32[1]{0}', space=sflag, size = 0x4, scoped, tag = 'scoped memory for hierarchy_flow_forward.1']
    %22 = vsyncpa [#allocation3], 0
    %23 = vsyncpa [#allocation5], 0
    %24 = vsyncpa [#allocation8], 0
    %25 = vsyncpa [#allocation11], 0
    %26 = vsyncpa [#allocation14], 0
    // Predicated region
    $region2: #{hierarchy_flow_forward.1} parent=1 // pred_check
      _
    $region3: #{hierarchy_flow_forward.1} parent=1 // pred_check_branch
      %28 = sbr.rel (0) target = $region5
    $region4: #{hierarchy_flow_forward.1} parent=1 // pred_region
      _
    $region5: #{hierarchy_flow_forward.1} parent=1 // pred_fallthru
      _
    // Predicated region
    $region6: #{hierarchy_flow_forward.1} parent=1 // pred_check
      _
    $region7: #{hierarchy_flow_forward.1} parent=1 // pred_check_branch
      %30 = sbr.rel (0) target = $region9
    $region8: #{hierarchy_flow_forward.1} parent=1 // pred_region
      %s32 = ssub.s32 32, 32
      %33 = vsyncadd [#allocation3], %s32
      %s35 = sshll.u32 [#allocation2], 4
      %s36 = int_to_ptr.vmem [resolvable:$true] %s35
      %38 = dma.hbm_to_vmem [thread:$0]  %s1, 32, %s36, [#allocation3]
    $region9: #{hierarchy_flow_forward.1} parent=1 // pred_fallthru
      _
    // Predicated region
    $region10: #{hierarchy_flow_forward.1} parent=1 // pred_check
      _
    $region11: #{hierarchy_flow_forward.1} parent=1 // pred_check_branch
      %40 = sbr.rel (0) target = $region13
    $region12: #{hierarchy_flow_forward.1} parent=1 // pred_region
      _
    $region13: #{hierarchy_flow_forward.1} parent=1 // pred_fallthru
      _
    // Predicated region
    $region14: #{hierarchy_flow_forward.1} parent=1 // pred_check
      _
    $region15: #{hierarchy_flow_forward.1} parent=1 // pred_check_branch
      %42 = sbr.rel (0) target = $region17
    $region16: #{hierarchy_flow_forward.1} parent=1 // pred_region
      _
    $region17: #{hierarchy_flow_forward.1} parent=1 // pred_fallthru
      _
    // Predicated region
    $region18: #{hierarchy_flow_forward.1} parent=1 // pred_check
      _
    $region19: #{hierarchy_flow_forward.1} parent=1 // pred_check_branch
      %44 = sbr.rel (0) target = $region21
    $region20: #{hierarchy_flow_forward.1} parent=1 // pred_region
      %s46 = ssub.s32 48, 48
      %47 = vsyncadd [#allocation5], %s46
      %s48 = sshll.u32 [#allocation4], 4
      %s49 = int_to_ptr.vmem [resolvable:$true] %s48
      %54 = dma.hbm_to_vmem [thread:$0]  %s4, 48, %s49, [#allocation5], 16, 16, 1
    $region21: #{hierarchy_flow_forward.1} parent=1 // pred_fallthru
      _
    // Predicated region
    $region22: #{hierarchy_flow_forward.1} parent=1 // pred_check
      _
    $region23: #{hierarchy_flow_forward.1} parent=1 // pred_check_branch
      %56 = sbr.rel (0) target = $region25
    $region24: #{hierarchy_flow_forward.1} parent=1 // pred_region
      %s58 = ssub.s32 768, 768
      %59 = vsyncadd [#allocation5], %s58
      %s60 = sshll.u32 [#allocation6], 4
      %s61 = int_to_ptr.vmem [resolvable:$true] %s60
      %66 = dma.hbm_to_vmem [thread:$0]  %s5, 768, %s61, [#allocation5], 64, 64, 4
    $region25: #{hierarchy_flow_forward.1} parent=1 // pred_fallthru
      _
    // Predicated region
    $region26: #{hierarchy_flow_forward.1} parent=1 // pred_check
      _
    $region27: #{hierarchy_flow_forward.1} parent=1 // pred_check_branch
      %68 = sbr.rel (0) target = $region29
    $region28: #{hierarchy_flow_forward.1} parent=1 // pred_region
      %s70 = ssub.s32 48, 48
      %71 = vsyncadd [#allocation8], %s70
      %s72 = sshll.u32 [#allocation7], 4
      %s73 = int_to_ptr.vmem [resolvable:$true] %s72
      %78 = dma.hbm_to_vmem [thread:$0]  %s6, 48, %s73, [#allocation8], 16, 16, 1
    $region29: #{hierarchy_flow_forward.1} parent=1 // pred_fallthru
      _
    // Predicated region
    $region30: #{hierarchy_flow_forward.1} parent=1 // pred_check
      _
    $region31: #{hierarchy_flow_forward.1} parent=1 // pred_check_branch
      %80 = sbr.rel (0) target = $region33
    $region32: #{hierarchy_flow_forward.1} parent=1 // pred_region
      %s82 = ssub.s32 1536, 1536
      %83 = vsyncadd [#allocation8], %s82
      %s84 = sshll.u32 [#allocation9], 4
      %s85 = int_to_ptr.vmem [resolvable:$true] %s84
      %90 = dma.hbm_to_vmem [thread:$0]  %s7, 1536, %s85, [#allocation8], 128, 128, 8
    $region33: #{hierarchy_flow_forward.1} parent=1 // pred_fallthru
      _
    // Predicated region
    $region34: #{hierarchy_flow_forward.1} parent=1 // pred_check
      _
    $region35: #{hierarchy_flow_forward.1} parent=1 // pred_check_branch
      %92 = sbr.rel (0) target = $region37
    $region36: #{hierarchy_flow_forward.1} parent=1 // pred_region
      %s94 = ssub.s32 48, 48
      %95 = vsyncadd [#allocation11], %s94
      %s96 = sshll.u32 [#allocation10], 4
      %s97 = int_to_ptr.vmem [resolvable:$true] %s96
      %102 = dma.hbm_to_vmem [thread:$0]  %s8, 48, %s97, [#allocation11], 16, 16, 1
    $region37: #{hierarchy_flow_forward.1} parent=1 // pred_fallthru
      _
    // Predicated region
    $region38: #{hierarchy_flow_forward.1} parent=1 // pred_check
      _
    $region39: #{hierarchy_flow_forward.1} parent=1 // pred_check_branch
      %104 = sbr.rel (0) target = $region41
    $region40: #{hierarchy_flow_forward.1} parent=1 // pred_region
      %s106 = ssub.s32 768, 768
      %107 = vsyncadd [#allocation11], %s106
      %s108 = sshll.u32 [#allocation12], 4
      %s109 = int_to_ptr.vmem [resolvable:$true] %s108
      %114 = dma.hbm_to_vmem [thread:$0]  %s9, 768, %s109, [#allocation11], 64, 64, 4
    $region41: #{hierarchy_flow_forward.1} parent=1 // pred_fallthru
      _
    // Predicated region
    $region42: #{hierarchy_flow_forward.1} parent=1 // pred_check
      _
    $region43: #{hierarchy_flow_forward.1} parent=1 // pred_check_branch
      %116 = sbr.rel (0) target = $region45
    $region44: #{hierarchy_flow_forward.1} parent=1 // pred_region
      %s118 = ssub.s32 48, 48
      %119 = vsyncadd [#allocation14], %s118
      %s120 = sshll.u32 [#allocation13], 4
      %s121 = int_to_ptr.vmem [resolvable:$true] %s120
      %126 = dma.hbm_to_vmem [thread:$0]  %s10, 48, %s121, [#allocation14], 16, 16, 1
    $region45: #{hierarchy_flow_forward.1} parent=1 // pred_fallthru
      _
    // Predicated region
    $region46: #{hierarchy_flow_forward.1} parent=1 // pred_check
      _
    $region47: #{hierarchy_flow_forward.1} parent=1 // pred_check_branch
      %128 = sbr.rel (0) target = $region49
    $region48: #{hierarchy_flow_forward.1} parent=1 // pred_region
      _
    $region49: #{hierarchy_flow_forward.1} parent=1 // pred_fallthru
      _
    // Predicated region
    $region50: #{hierarchy_flow_forward.1} parent=1 // pred_check
      _
    $region51: #{hierarchy_flow_forward.1} parent=1 // pred_check_branch
      %130 = sbr.rel (0) target = $region53
    $region52: #{hierarchy_flow_forward.1} parent=1 // pred_region
      _
    $region53: #{hierarchy_flow_forward.1} parent=1 // pred_fallthru
      _
    // Predicated region
    $region54: #{hierarchy_flow_forward.1} parent=1 // pred_check
      _
    $region55: #{hierarchy_flow_forward.1} parent=1 // pred_check_branch
      %132 = sbr.rel (0) target = $region57
    $region56: #{hierarchy_flow_forward.1} parent=1 // pred_region
      _
    $region57: #{hierarchy_flow_forward.1} parent=1 // pred_fallthru
      _
    // Predicated region
    $region58: #{hierarchy_flow_forward.1} parent=1 // pred_check
      _
    $region59: #{hierarchy_flow_forward.1} parent=1 // pred_check_branch
      %134 = sbr.rel (0) target = $region61
    $region60: #{hierarchy_flow_forward.1} parent=1 // pred_region
      _
    $region61: #{hierarchy_flow_forward.1} parent=1 // pred_fallthru
      _
    // Predicated region
    $region62: #{hierarchy_flow_forward.1} parent=1 // pred_check
      _
    $region63: #{hierarchy_flow_forward.1} parent=1 // pred_check_branch
      %136 = sbr.rel (0) target = $region65
    $region64: #{hierarchy_flow_forward.1} parent=1 // pred_region
      _
    $region65: #{hierarchy_flow_forward.1} parent=1 // pred_fallthru
      _
    // Predicated region
    $region66: #{hierarchy_flow_forward.1} parent=1 // pred_check
      _
    $region67: #{hierarchy_flow_forward.1} parent=1 // pred_check_branch
      %138 = sbr.rel (0) target = $region69
    $region68: #{hierarchy_flow_forward.1} parent=1 // pred_region
      _
    $region69: #{hierarchy_flow_forward.1} parent=1 // pred_fallthru
      _
    // Predicated region
    $region70: #{hierarchy_flow_forward.1} parent=1 // pred_check
      _
    $region71: #{hierarchy_flow_forward.1} parent=1 // pred_check_branch
      %140 = sbr.rel (0) target = $region73
    $region72: #{hierarchy_flow_forward.1} parent=1 // pred_region
      %141 = dma.done [#allocation3], 32
    $region73: #{hierarchy_flow_forward.1} parent=1 // pred_fallthru
      _
    // Predicated region
    $region74: #{hierarchy_flow_forward.1} parent=1 // pred_check
      _
    $region75: #{hierarchy_flow_forward.1} parent=1 // pred_check_branch
      %143 = sbr.rel (0) target = $region77
    $region76: #{hierarchy_flow_forward.1} parent=1 // pred_region
      %144 = dma.done [#allocation5], 48
    $region77: #{hierarchy_flow_forward.1} parent=1 // pred_fallthru
      _
    // Predicated region
    $region78: #{hierarchy_flow_forward.1} parent=1 // pred_check
      _
    $region79: #{hierarchy_flow_forward.1} parent=1 // pred_check_branch
      %146 = sbr.rel (0) target = $region81
    $region80: #{hierarchy_flow_forward.1} parent=1 // pred_region
      %147 = dma.done [#allocation5], 768
    $region81: #{hierarchy_flow_forward.1} parent=1 // pred_fallthru
      _
    // Predicated region
    $region82: #{hierarchy_flow_forward.1} parent=1 // pred_check
      _
    $region83: #{hierarchy_flow_forward.1} parent=1 // pred_check_branch
      %149 = sbr.rel (0) target = $region85
    $region84: #{hierarchy_flow_forward.1} parent=1 // pred_region
      %150 = dma.done [#allocation8], 48
    $region85: #{hierarchy_flow_forward.1} parent=1 // pred_fallthru
      _
    // Predicated region
    $region86: #{hierarchy_flow_forward.1} parent=1 // pred_check
      _
    $region87: #{hierarchy_flow_forward.1} parent=1 // pred_check_branch
      %152 = sbr.rel (0) target = $region89
    $region88: #{hierarchy_flow_forward.1} parent=1 // pred_region
      %153 = dma.done [#allocation8], 1536
    $region89: #{hierarchy_flow_forward.1} parent=1 // pred_fallthru
      _
    // Predicated region
    $region90: #{hierarchy_flow_forward.1} parent=1 // pred_check
      _
    $region91: #{hierarchy_flow_forward.1} parent=1 // pred_check_branch
      %155 = sbr.rel (0) target = $region93
    $region92: #{hierarchy_flow_forward.1} parent=1 // pred_region
      %156 = dma.done [#allocation11], 48
    $region93: #{hierarchy_flow_forward.1} parent=1 // pred_fallthru
      _
    // Predicated region
    $region94: #{hierarchy_flow_forward.1} parent=1 // pred_check
      _
    $region95: #{hierarchy_flow_forward.1} parent=1 // pred_check_branch
      %158 = sbr.rel (0) target = $region97
    $region96: #{hierarchy_flow_forward.1} parent=1 // pred_region
      %159 = dma.done [#allocation11], 768
    $region97: #{hierarchy_flow_forward.1} parent=1 // pred_fallthru
      _
    // Predicated region
    $region98: #{hierarchy_flow_forward.1} parent=1 // pred_check
      _
    $region99: #{hierarchy_flow_forward.1} parent=1 // pred_check_branch
      %161 = sbr.rel (0) target = $region101
    $region100: #{hierarchy_flow_forward.1} parent=1 // pred_region
      %162 = dma.done [#allocation14], 48
    $region101: #{hierarchy_flow_forward.1} parent=1 // pred_fallthru
      _
    %v164 = vld [vmem:[%s0] sm:$0xff]
    %v165 = vld [vmem:[%s0 + $0x8] sm:$0xff]
    %v166 = vld [vmem:[%s0 + $0x10] sm:$0xff]
    %v167 = vld [vmem:[%s0 + $0x18] sm:$0xff]
    %v168 = vlaneseq
    %v169 = vshrl.u32 %v168, 7
    %v170 = vadd.s32 %v169, 8
    %v171 = vadd.s32 %v169, 16
    %v172 = vadd.s32 %v169, 24
    %vm173 = vcmp.lt.s32.totalorder %v169, 0
    %v174 = vsub.s32 0, %v169
    %v175 = vsel %vm173, %v174, %v169
    %v176 = vshrl.u32 %v175, 4
    %v177 = vand.u32 %v175, 15
    %v178 = vsub.s32 0, %v177
    %v179 = vsel %vm173, %v178, %v177
    %vm180 = vcmp.lt.s32.totalorder %v170, 0
    %v181 = vsub.s32 0, %v170
    %v182 = vsel %vm180, %v181, %v170
    %v183 = vshrl.u32 %v182, 4
    %v184 = vand.u32 %v182, 15
    %v185 = vsub.s32 0, %v184
    %v186 = vsel %vm180, %v185, %v184
    %vm187 = vcmp.lt.s32.totalorder %v171, 0
    %v188 = vsub.s32 0, %v171
    %v189 = vsel %vm187, %v188, %v171
    %v190 = vshrl.u32 %v189, 4
    %v191 = vand.u32 %v189, 15
    %v192 = vsub.s32 0, %v191
    %v193 = vsel %vm187, %v192, %v191
    %vm194 = vcmp.lt.s32.totalorder %v172, 0
    %v195 = vsub.s32 0, %v172
    %v196 = vsel %vm194, %v195, %v172
    %v197 = vshrl.u32 %v196, 4
    %v198 = vand.u32 %v196, 15
    %v199 = vsub.s32 0, %v198
    %v200 = vsel %vm194, %v199, %v198
    %vm201 = vcmp.ne.s32.totalorder %v179, 0
    %vm202 = vcmp.ne.s32.totalorder %v186, 0
    %vm203 = vcmp.ne.s32.totalorder %v193, 0
    %vm204 = vcmp.ne.s32.totalorder %v200, 0
    %vm205 = vcmp.lt.s32.totalorder %v179, 0
    %vm206 = vcmp.lt.s32.totalorder %v186, 0
    %vm207 = vcmp.lt.s32.totalorder %v193, 0
    %vm208 = vcmp.lt.s32.totalorder %v200, 0
    %vm209 = vmand %vm205, %vm201
    %vm210 = vmand %vm206, %vm202
    %vm211 = vmand %vm207, %vm203
    %vm212 = vmand %vm208, %vm204
    %v213 = vadd.s32 %v179, 16
    %v214 = vadd.s32 %v186, 16
    %v215 = vadd.s32 %v193, 16
    %v216 = vadd.s32 %v200, 16
    %v217 = vsel %vm209, %v213, %v179
    %v218 = vsel %vm210, %v214, %v186
    %v219 = vsel %vm211, %v215, %v193
    %v220 = vsel %vm212, %v216, %v200
    %vm221 = vcmp.ge.s32.totalorder %v217, 1
    %vm222 = vcmp.ge.s32.totalorder %v218, 1
    %vm223 = vcmp.ge.s32.totalorder %v219, 1
    %vm224 = vcmp.ge.s32.totalorder %v220, 1
    %vm225 = vcmp.lt.s32.totalorder %v217, 15
    %vm226 = vcmp.lt.s32.totalorder %v218, 15
    %vm227 = vcmp.lt.s32.totalorder %v219, 15
    %vm228 = vcmp.lt.s32.totalorder %v220, 15
    %vm229 = vcmp.ge.s32.totalorder %v217, 2
    %vm230 = vcmp.ge.s32.totalorder %v218, 2
    %vm231 = vcmp.ge.s32.totalorder %v219, 2
    %vm232 = vcmp.ge.s32.totalorder %v220, 2
    %vm233 = vcmp.lt.s32.totalorder %v217, 14
    %vm234 = vcmp.lt.s32.totalorder %v218, 14
    %vm235 = vcmp.lt.s32.totalorder %v219, 14
    %vm236 = vcmp.lt.s32.totalorder %v220, 14
    %vm237 = vcmp.ge.s32.totalorder %v217, 4
    %vm238 = vcmp.ge.s32.totalorder %v218, 4
    %vm239 = vcmp.ge.s32.totalorder %v219, 4
    %vm240 = vcmp.ge.s32.totalorder %v220, 4
    %vm241 = vcmp.lt.s32.totalorder %v217, 12
    %vm242 = vcmp.lt.s32.totalorder %v218, 12
    %vm243 = vcmp.lt.s32.totalorder %v219, 12
    %vm244 = vcmp.lt.s32.totalorder %v220, 12
    %v245 = vld [vmem:[#allocation2] sm:$0x3]
    %v246 = vpack.c.bf16 %v165, %v164
    %v247 = vpack.c.bf16 %v167, %v166
    %v248 = vld [vmem:[%s2] sm:$0x1]
    %v250 = vlaneseq
    %v251 = vshrl.u32 %v250, 7
    %v252 = vsub.s32 0, %v251
    %v253 = vrot.slane %v248, %v252
    %vm255 = vcmask 31744
    %v257 = vsel %vm255, %v246, 0
    %v260 = vsel %vm255, %v247, 0
    %vm262 = vcmask 1041408
    %v264 = vsel %vm262, %v245, 0
    %266 = vmatprep.subr.bf16.mxu0 0
    %267 = vmatpush1.bf16.msra.mxu0 %v264
    %268 = vmatprep.subr.bf16.mxu0 0
    %269 = vmatpush1.bf16.msra.mxu0 0
    %270 = vmatprep.subr.bf16.mxu0 0
    %271 = vmatpush1.bf16.msra.mxu0 0
    %272 = vmatprep.subr.bf16.mxu0 0
    %273 = vmatpush1.bf16.msra.mxu0 0
    %274 = vmatprep.subr.bf16.mxu0 0
    %275 = vmatpush1.bf16.msra.mxu0 0
    %276 = vmatprep.subr.bf16.mxu0 0
    %277 = vmatpush1.bf16.msra.mxu0 0
    %278 = vmatprep.subr.bf16.mxu0 0
    %279 = vmatpush1.bf16.msra.mxu0 0
    %280 = vmatprep.subr.bf16.mxu0 0
    %281 = vmatpush1.bf16.msra.mxu0 0
    %282 = vmatprep.subr.bf16.mxu0 0
    %283 = vmatpush1.bf16.msra.mxu0 0
    %284 = vmatprep.subr.bf16.mxu0 0
    %285 = vmatpush1.bf16.msra.mxu0 0
    %286 = vmatprep.subr.bf16.mxu0 0
    %287 = vmatpush1.bf16.msra.mxu0 0
    %288 = vmatprep.subr.bf16.mxu0 0
    %289 = vmatpush1.bf16.msra.mxu0 0
    %290 = vmatprep.subr.bf16.mxu0 0
    %291 = vmatpush1.bf16.msra.mxu0 0
    %292 = vmatprep.subr.bf16.mxu0 0
    %293 = vmatpush1.bf16.msra.mxu0 0
    %294 = vmatprep.subr.bf16.mxu0 0
    %295 = vmatpush1.bf16.msra.mxu0 0
    %296 = vmatprep.subr.bf16.mxu0 0
    %297 = vmatpush1.bf16.msra.mxu0 0
    %298 = vmatprep.mubr.bf16.mxu0 0
    %299 = vmatmul.mubr.bf16.gmra.mrb[0].mxu0 %v257
    %v300 = vpop.f32.mrb[0].mxu0
    %v301 = vadd.f32 %v253, %v300
    %v302 = vpop.f32.mrb[0].mxu0
    %v303 = vpop.f32.mrb[0].mxu0
    %v304 = vadd.f32 %v253, %v303
    %v305 = vpop.f32.mrb[0].mxu0
    %306 = vmatprep.mubr.bf16.mxu0 0
    %307 = vmatmul.mubr.bf16.gmra.mrb[0].mxu0 %v260
    %v308 = vpop.f32.mrb[0].mxu0
    %v309 = vadd.f32 %v253, %v308
    %v310 = vpop.f32.mrb[0].mxu0
    %v311 = vpop.f32.mrb[0].mxu0
    %v312 = vadd.f32 %v253, %v311
    %v313 = vpop.f32.mrb[0].mxu0
    %314 = vdwg.mxu0
    %v315 = vld [vmem:[%s3] sm:$0xff]
    %v316 = vld [vmem:[%s3 + $0x8] sm:$0xff]
    %v317 = vld [vmem:[%s3 + $0x10] sm:$0xff]
    %v318 = vld [vmem:[%s3 + $0x18] sm:$0xff]
    %v319 = vpack.c.bf16 %v304, %v301
    %v320 = vpack.c.bf16 %v312, %v309
    %v325 = vunpack.c.l.b16 %v315
    %v326 = vunpack.c.h.b16 %v315
    %v327 = vunpack.c.l.b16 %v316
    %v328 = vunpack.c.h.b16 %v316
    %v329 = vunpack.c.l.b16 %v317
    %v330 = vunpack.c.h.b16 %v317
    %v331 = vunpack.c.l.b16 %v318
    %v332 = vunpack.c.h.b16 %v318
    %v333 = vpack.c.b16 %v327, %v325
    %v334 = vpack.c.b16 %v328, %v326
    %v335 = vpack.c.b16 %v331, %v329
    %v336 = vpack.c.b16 %v332, %v330
    %vm341 = vcmask 261120
    %v343 = vsel %vm341, %v319, 0
    %v346 = vsel %vm341, %v320, 0
    %348 = vmatprep.subr.bf16.mxu0 %v334
    %349 = vmatpush1.bf16.msra.mxu0 %v333
    %350 = vmatprep.subr.bf16.mxu0 %v336
    %351 = vmatpush1.bf16.msra.mxu0 %v335
    %352 = vmatprep.subr.bf16.mxu0 0
    %353 = vmatpush1.bf16.msra.mxu0 0
    %354 = vmatprep.subr.bf16.mxu0 0
    %355 = vmatpush1.bf16.msra.mxu0 0
    %356 = vmatprep.subr.bf16.mxu0 0
    %357 = vmatpush1.bf16.msra.mxu0 0
    %358 = vmatprep.subr.bf16.mxu0 0
    %359 = vmatpush1.bf16.msra.mxu0 0
    %360 = vmatprep.subr.bf16.mxu0 0
    %361 = vmatpush1.bf16.msra.mxu0 0
    %362 = vmatprep.subr.bf16.mxu0 0
    %363 = vmatpush1.bf16.msra.mxu0 0
    %364 = vmatprep.subr.bf16.mxu0 0
    %365 = vmatpush1.bf16.msra.mxu0 0
    %366 = vmatprep.subr.bf16.mxu0 0
    %367 = vmatpush1.bf16.msra.mxu0 0
    %368 = vmatprep.subr.bf16.mxu0 0
    %369 = vmatpush1.bf16.msra.mxu0 0
    %370 = vmatprep.subr.bf16.mxu0 0
    %371 = vmatpush1.bf16.msra.mxu0 0
    %372 = vmatprep.subr.bf16.mxu0 0
    %373 = vmatpush1.bf16.msra.mxu0 0
    %374 = vmatprep.subr.bf16.mxu0 0
    %375 = vmatpush1.bf16.msra.mxu0 0
    %376 = vmatprep.subr.bf16.mxu0 0
    %377 = vmatpush1.bf16.msra.mxu0 0
    %378 = vmatprep.subr.bf16.mxu0 0
    %379 = vmatpush1.bf16.msra.mxu0 0
    %380 = vmatprep.mubr.bf16.mxu0 0
    %381 = vmatmul.mubr.bf16.gmra.mrb[0].mxu0 %v343
    %v382 = vpop.f32.mrb[0].mxu0
    %v383 = vadd.f32 0.0, %v382
    %v384 = vpop.f32.mrb[0].mxu0
    %v385 = vadd.f32 0.0, %v384
    %v386 = vpop.f32.mrb[0].mxu0
    %v387 = vadd.f32 0.0, %v386
    %v388 = vpop.f32.mrb[0].mxu0
    %v389 = vadd.f32 0.0, %v388
    %390 = vmatprep.mubr.bf16.mxu0 0
    %391 = vmatmul.mubr.bf16.gmra.mrb[0].mxu0 %v346
    %v392 = vpop.f32.mrb[0].mxu0
    %v393 = vadd.f32 0.0, %v392
    %v394 = vpop.f32.mrb[0].mxu0
    %v395 = vadd.f32 0.0, %v394
    %v396 = vpop.f32.mrb[0].mxu0
    %v397 = vadd.f32 0.0, %v396
    %v398 = vpop.f32.mrb[0].mxu0
    %v399 = vadd.f32 0.0, %v398
    %400 = vdwg.mxu0
    %v401 = vrot.slane %v383, 7
    %v402 = vrot.slane %v387, 7
    %v403 = vrot.slane %v393, 7
    %v404 = vrot.slane %v397, 7
    %vm405 = vcmp.lt.s32.totalorder %v169, 1
    %v406 = vsel %vm405, %v403, %v404
    %v407 = vsel %vm405, %v402, %v403
    %v408 = vsel %vm405, %v401, %v402
    %v409 = vsel %vm405, %v404, %v401
    %v410 = vrot.slane %v385, 1
    %v411 = vrot.slane %v389, 1
    %v412 = vrot.slane %v395, 1
    %v413 = vrot.slane %v399, 1
    %vm414 = vcmp.lt.s32.totalorder %v169, 7
    %v415 = vsel %vm414, %v412, %v413
    %v416 = vsel %vm414, %v411, %v412
    %v417 = vsel %vm414, %v410, %v411
    %v418 = vsel %vm414, %v413, %v410
    %v419 = vsel %vm221, %v409, 0.0
    %v420 = vsel %vm222, %v408, 0.0
    %v421 = vsel %vm223, %v407, 0.0
    %v422 = vsel %vm224, %v406, 0.0
    %427 = vrot.lane.b32.xlu0 %v419, 64
    %v428 = vpop.permute.xlu0 %427
    %429 = vrot.lane.b32.xlu0 %v420, 64
    %v430 = vpop.permute.xlu0 %429
    %431 = vrot.lane.b32.xlu0 %v421, 64
    %v432 = vpop.permute.xlu0 %431
    %433 = vrot.lane.b32.xlu0 %v422, 64
    %v434 = vpop.permute.xlu0 %433
    %v439 = vadd.f32 %v383, %v428
    %v440 = vadd.f32 %v387, %v430
    %v441 = vadd.f32 %v393, %v432
    %v442 = vadd.f32 %v397, %v434
    %v443 = vsel %vm225, %v417, 0.0
    %v444 = vsel %vm226, %v416, 0.0
    %v445 = vsel %vm227, %v415, 0.0
    %v446 = vsel %vm228, %v418, 0.0
    %451 = vrot.lane.b32.xlu0 %v443, 64
    %v452 = vpop.permute.xlu0 %451
    %453 = vrot.lane.b32.xlu0 %v444, 64
    %v454 = vpop.permute.xlu0 %453
    %455 = vrot.lane.b32.xlu0 %v445, 64
    %v456 = vpop.permute.xlu0 %455
    %457 = vrot.lane.b32.xlu0 %v446, 64
    %v458 = vpop.permute.xlu0 %457
    %v463 = vadd.f32 %v439, %v452
    %v464 = vadd.f32 %v440, %v454
    %v465 = vadd.f32 %v441, %v456
    %v466 = vadd.f32 %v442, %v458
    %v467 = vld [vmem:[#allocation4] sm:$0x1]
    %v469 = vlaneseq
    %v470 = vshrl.u32 %v469, 7
    %v471 = vsub.s32 0, %v470
    %v472 = vrot.slane %v467, %v471
    %473 = vrot.lane.b32.xlu0 %v472, 64
    %v474 = vpop.permute.xlu0 %473
    %v476 = vadd.f32 %v463, %v474
    %v477 = vadd.f32 %v464, %v474
    %v478 = vadd.f32 %v465, %v474
    %v479 = vadd.f32 %v466, %v474
    %v480 = vtanh.pop %v476
    %v481 = vtanh.pop %v477
    %v482 = vtanh.pop %v478
    %v483 = vtanh.pop %v479
    %v484 = vxor.u32 %v476, 2147483648
    %v485 = vxor.u32 %v477, 2147483648
    %v486 = vxor.u32 %v478, 2147483648
    %v487 = vxor.u32 %v479, 2147483648
    %v488 = vmul.f32 %v484, 1.442695
    %v489 = vpow.pop %v488
    %v490 = vmul.f32 %v485, 1.442695
    %v491 = vpow.pop %v490
    %v492 = vmul.f32 %v486, 1.442695
    %v493 = vpow.pop %v492
    %v494 = vmul.f32 %v487, 1.442695
    %v495 = vpow.pop %v494
    %v496 = vadd.f32 %v489, 1.0
    %v497 = vadd.f32 %v491, 1.0
    %v498 = vadd.f32 %v493, 1.0
    %v499 = vadd.f32 %v495, 1.0
    %v500 = vrcp.pop %v496
    %v501 = vmul.f32 1.0, %v500
    %v502 = vrcp.pop %v497
    %v503 = vmul.f32 1.0, %v502
    %v504 = vrcp.pop %v498
    %v505 = vmul.f32 1.0, %v504
    %v506 = vrcp.pop %v499
    %v507 = vmul.f32 1.0, %v506
    %512 = vrot.lane.b32.xlu0 %v501, 96
    %v513 = vpop.permute.xlu0 %512
    %514 = vrot.lane.b32.xlu0 %v503, 96
    %v515 = vpop.permute.xlu0 %514
    %516 = vrot.lane.b32.xlu0 %v505, 96
    %v517 = vpop.permute.xlu0 %516
    %518 = vrot.lane.b32.xlu0 %v507, 96
    %v519 = vpop.permute.xlu0 %518
    %v524 = vmul.f32 %v480, %v513
    %v525 = vmul.f32 %v481, %v515
    %v526 = vmul.f32 %v482, %v517
    %v527 = vmul.f32 %v483, %v519
    %v528 = vld [vmem:[#allocation6] sm:$0xf]
    %v529 = vld [vmem:[#allocation6 + $0x4] sm:$0xf]
    %v530 = vld [vmem:[#allocation6 + $0x8] sm:$0xf]
    %v531 = vld [vmem:[#allocation6 + $0xc] sm:$0xf]
    %v532 = vpack.c.bf16 %v525, %v524
    %v533 = vpack.c.bf16 %v527, %v526
    %v534 = vld [vmem:[#allocation7] sm:$0x1]
    %v536 = vlaneseq
    %v537 = vshrl.u32 %v536, 7
    %v538 = vsub.s32 0, %v537
    %v539 = vrot.slane %v534, %v538
    %543 = vrot.lane.b32.xlu0 %v532, 64
    %v544 = vpop.permute.xlu0 %543
    %545 = vrot.lane.b32.xlu0 %v533, 64
    %v546 = vpop.permute.xlu0 %545
    %v551 = vunpack.c.l.b16 %v528
    %v552 = vunpack.c.l.b16 %v529
    %v553 = vunpack.c.l.b16 %v530
    %v554 = vunpack.c.l.b16 %v531
    %v555 = vpack.c.b16 %v552, %v551
    %v556 = vpack.c.b16 %v554, %v553
    %v560 = vsel %vm341, %v544, 0
    %v563 = vsel %vm341, %v546, 0
    %565 = vmatprep.subr.bf16.mxu0 0
    %566 = vmatpush1.bf16.msra.mxu0 %v555
    %567 = vmatprep.subr.bf16.mxu0 0
    %568 = vmatpush1.bf16.msra.mxu0 %v556
    %569 = vmatprep.subr.bf16.mxu0 0
    %570 = vmatpush1.bf16.msra.mxu0 0
    %571 = vmatprep.subr.bf16.mxu0 0
    %572 = vmatpush1.bf16.msra.mxu0 0
    %573 = vmatprep.subr.bf16.mxu0 0
    %574 = vmatpush1.bf16.msra.mxu0 0
    %575 = vmatprep.subr.bf16.mxu0 0
    %576 = vmatpush1.bf16.msra.mxu0 0
    %577 = vmatprep.subr.bf16.mxu0 0
    %578 = vmatpush1.bf16.msra.mxu0 0
    %579 = vmatprep.subr.bf16.mxu0 0
    %580 = vmatpush1.bf16.msra.mxu0 0
    %581 = vmatprep.subr.bf16.mxu0 0
    %582 = vmatpush1.bf16.msra.mxu0 0
    %583 = vmatprep.subr.bf16.mxu0 0
    %584 = vmatpush1.bf16.msra.mxu0 0
    %585 = vmatprep.subr.bf16.mxu0 0
    %586 = vmatpush1.bf16.msra.mxu0 0
    %587 = vmatprep.subr.bf16.mxu0 0
    %588 = vmatpush1.bf16.msra.mxu0 0
    %589 = vmatprep.subr.bf16.mxu0 0
    %590 = vmatpush1.bf16.msra.mxu0 0
    %591 = vmatprep.subr.bf16.mxu0 0
    %592 = vmatpush1.bf16.msra.mxu0 0
    %593 = vmatprep.subr.bf16.mxu0 0
    %594 = vmatpush1.bf16.msra.mxu0 0
    %595 = vmatprep.subr.bf16.mxu0 0
    %596 = vmatpush1.bf16.msra.mxu0 0
    %597 = vmatprep.mubr.bf16.mxu0 0
    %598 = vmatmul.mubr.bf16.gmra.mrb[0].mxu0 %v560
    %v599 = vpop.f32.mrb[0].mxu0
    %v600 = vadd.f32 %v539, %v599
    %v601 = vpop.f32.mrb[0].mxu0
    %v602 = vpop.f32.mrb[0].mxu0
    %v603 = vadd.f32 %v539, %v602
    %v604 = vpop.f32.mrb[0].mxu0
    %605 = vmatprep.mubr.bf16.mxu0 0
    %606 = vmatmul.mubr.bf16.gmra.mrb[0].mxu0 %v563
    %v607 = vpop.f32.mrb[0].mxu0
    %v608 = vadd.f32 %v539, %v607
    %v609 = vpop.f32.mrb[0].mxu0
    %v610 = vpop.f32.mrb[0].mxu0
    %v611 = vadd.f32 %v539, %v610
    %v612 = vpop.f32.mrb[0].mxu0
    %613 = vdwg.mxu0
    %v614 = vadd.f32 %v301, %v600
    %v615 = vadd.f32 %v304, %v603
    %v616 = vadd.f32 %v309, %v608
    %v617 = vadd.f32 %v312, %v611
    %s618 = scalar_lea.vmem %s3, 32
    %v619 = vld [vmem:[%s618] sm:$0xff]
    %v620 = vld [vmem:[%s618 + $0x8] sm:$0xff]
    %v621 = vld [vmem:[%s618 + $0x10] sm:$0xff]
    %v622 = vld [vmem:[%s618 + $0x18] sm:$0xff]
    %v623 = vpack.c.bf16 %v615, %v614
    %v624 = vpack.c.bf16 %v617, %v616
    %v629 = vunpack.c.l.b16 %v619
    %v630 = vunpack.c.h.b16 %v619
    %v631 = vunpack.c.l.b16 %v620
    %v632 = vunpack.c.h.b16 %v620
    %v633 = vunpack.c.l.b16 %v621
    %v634 = vunpack.c.h.b16 %v621
    %v635 = vunpack.c.l.b16 %v622
    %v636 = vunpack.c.h.b16 %v622
    %v637 = vpack.c.b16 %v631, %v629
    %v638 = vpack.c.b16 %v632, %v630
    %v639 = vpack.c.b16 %v635, %v633
    %v640 = vpack.c.b16 %v636, %v634
    %v646 = vsel %vm341, %v623, 0
    %v649 = vsel %vm341, %v624, 0
    %651 = vmatprep.subr.bf16.mxu0 %v638
    %652 = vmatpush1.bf16.msra.mxu0 %v637
    %653 = vmatprep.subr.bf16.mxu0 %v640
    %654 = vmatpush1.bf16.msra.mxu0 %v639
    %655 = vmatprep.subr.bf16.mxu0 0
    %656 = vmatpush1.bf16.msra.mxu0 0
    %657 = vmatprep.subr.bf16.mxu0 0
    %658 = vmatpush1.bf16.msra.mxu0 0
    %659 = vmatprep.subr.bf16.mxu0 0
    %660 = vmatpush1.bf16.msra.mxu0 0
    %661 = vmatprep.subr.bf16.mxu0 0
    %662 = vmatpush1.bf16.msra.mxu0 0
    %663 = vmatprep.subr.bf16.mxu0 0
    %664 = vmatpush1.bf16.msra.mxu0 0
    %665 = vmatprep.subr.bf16.mxu0 0
    %666 = vmatpush1.bf16.msra.mxu0 0
    %667 = vmatprep.subr.bf16.mxu0 0
    %668 = vmatpush1.bf16.msra.mxu0 0
    %669 = vmatprep.subr.bf16.mxu0 0
    %670 = vmatpush1.bf16.msra.mxu0 0
    %671 = vmatprep.subr.bf16.mxu0 0
    %672 = vmatpush1.bf16.msra.mxu0 0
    %673 = vmatprep.subr.bf16.mxu0 0
    %674 = vmatpush1.bf16.msra.mxu0 0
    %675 = vmatprep.subr.bf16.mxu0 0
    %676 = vmatpush1.bf16.msra.mxu0 0
    %677 = vmatprep.subr.bf16.mxu0 0
    %678 = vmatpush1.bf16.msra.mxu0 0
    %679 = vmatprep.subr.bf16.mxu0 0
    %680 = vmatpush1.bf16.msra.mxu0 0
    %681 = vmatprep.subr.bf16.mxu0 0
    %682 = vmatpush1.bf16.msra.mxu0 0
    %683 = vmatprep.mubr.bf16.mxu0 0
    %684 = vmatmul.mubr.bf16.gmra.mrb[0].mxu0 %v646
    %v685 = vpop.f32.mrb[0].mxu0
    %v686 = vadd.f32 0.0, %v685
    %v687 = vpop.f32.mrb[0].mxu0
    %v688 = vadd.f32 0.0, %v687
    %v689 = vpop.f32.mrb[0].mxu0
    %v690 = vadd.f32 0.0, %v689
    %v691 = vpop.f32.mrb[0].mxu0
    %v692 = vadd.f32 0.0, %v691
    %693 = vmatprep.mubr.bf16.mxu0 0
    %694 = vmatmul.mubr.bf16.gmra.mrb[0].mxu0 %v649
    %v695 = vpop.f32.mrb[0].mxu0
    %v696 = vadd.f32 0.0, %v695
    %v697 = vpop.f32.mrb[0].mxu0
    %v698 = vadd.f32 0.0, %v697
    %v699 = vpop.f32.mrb[0].mxu0
    %v700 = vadd.f32 0.0, %v699
    %v701 = vpop.f32.mrb[0].mxu0
    %v702 = vadd.f32 0.0, %v701
    %703 = vdwg.mxu0
    %v704 = vrot.slane %v686, 6
    %v705 = vrot.slane %v690, 6
    %v706 = vrot.slane %v696, 6
    %v707 = vrot.slane %v700, 6
    %vm708 = vcmp.lt.s32.totalorder %v169, 2
    %v709 = vsel %vm708, %v706, %v707
    %v710 = vsel %vm708, %v705, %v706
    %v711 = vsel %vm708, %v704, %v705
    %v712 = vsel %vm708, %v707, %v704
    %v713 = vrot.slane %v688, 2
    %v714 = vrot.slane %v692, 2
    %v715 = vrot.slane %v698, 2
    %v716 = vrot.slane %v702, 2
    %vm717 = vcmp.lt.s32.totalorder %v169, 6
    %v718 = vsel %vm717, %v715, %v716
    %v719 = vsel %vm717, %v714, %v715
    %v720 = vsel %vm717, %v713, %v714
    %v721 = vsel %vm717, %v716, %v713
    %v722 = vsel %vm229, %v712, 0.0
    %v723 = vsel %vm230, %v711, 0.0
    %v724 = vsel %vm231, %v710, 0.0
    %v725 = vsel %vm232, %v709, 0.0
    %730 = vrot.lane.b32.xlu0 %v722, 64
    %v731 = vpop.permute.xlu0 %730
    %732 = vrot.lane.b32.xlu0 %v723, 64
    %v733 = vpop.permute.xlu0 %732
    %734 = vrot.lane.b32.xlu0 %v724, 64
    %v735 = vpop.permute.xlu0 %734
    %736 = vrot.lane.b32.xlu0 %v725, 64
    %v737 = vpop.permute.xlu0 %736
    %v742 = vadd.f32 %v686, %v731
    %v743 = vadd.f32 %v690, %v733
    %v744 = vadd.f32 %v696, %v735
    %v745 = vadd.f32 %v700, %v737
    %v746 = vsel %vm233, %v720, 0.0
    %v747 = vsel %vm234, %v719, 0.0
    %v748 = vsel %vm235, %v718, 0.0
    %v749 = vsel %vm236, %v721, 0.0
    %754 = vrot.lane.b32.xlu0 %v746, 64
    %v755 = vpop.permute.xlu0 %754
    %756 = vrot.lane.b32.xlu0 %v747, 64
    %v757 = vpop.permute.xlu0 %756
    %758 = vrot.lane.b32.xlu0 %v748, 64
    %v759 = vpop.permute.xlu0 %758
    %760 = vrot.lane.b32.xlu0 %v749, 64
    %v761 = vpop.permute.xlu0 %760
    %v766 = vadd.f32 %v742, %v755
    %v767 = vadd.f32 %v743, %v757
    %v768 = vadd.f32 %v744, %v759
    %v769 = vadd.f32 %v745, %v761
    %s770 = scalar_lea.vmem [#allocation4], 1
    %v771 = vld [vmem:[%s770] sm:$0x1]
    %v773 = vlaneseq
    %v774 = vshrl.u32 %v773, 7
    %v775 = vsub.s32 0, %v774
    %v776 = vrot.slane %v771, %v775
    %777 = vrot.lane.b32.xlu0 %v776, 64
    %v778 = vpop.permute.xlu0 %777
    %v780 = vadd.f32 %v766, %v778
    %v781 = vadd.f32 %v767, %v778
    %v782 = vadd.f32 %v768, %v778
    %v783 = vadd.f32 %v769, %v778
    %v784 = vtanh.pop %v780
    %v785 = vtanh.pop %v781
    %v786 = vtanh.pop %v782
    %v787 = vtanh.pop %v783
    %v788 = vxor.u32 %v780, 2147483648
    %v789 = vxor.u32 %v781, 2147483648
    %v790 = vxor.u32 %v782, 2147483648
    %v791 = vxor.u32 %v783, 2147483648
    %v792 = vmul.f32 %v788, 1.442695
    %v793 = vpow.pop %v792
    %v794 = vmul.f32 %v789, 1.442695
    %v795 = vpow.pop %v794
    %v796 = vmul.f32 %v790, 1.442695
    %v797 = vpow.pop %v796
    %v798 = vmul.f32 %v791, 1.442695
    %v799 = vpow.pop %v798
    %v800 = vadd.f32 %v793, 1.0
    %v801 = vadd.f32 %v795, 1.0
    %v802 = vadd.f32 %v797, 1.0
    %v803 = vadd.f32 %v799, 1.0
    %v804 = vrcp.pop %v800
    %v805 = vmul.f32 1.0, %v804
    %v806 = vrcp.pop %v801
    %v807 = vmul.f32 1.0, %v806
    %v808 = vrcp.pop %v802
    %v809 = vmul.f32 1.0, %v808
    %v810 = vrcp.pop %v803
    %v811 = vmul.f32 1.0, %v810
    %816 = vrot.lane.b32.xlu0 %v805, 96
    %v817 = vpop.permute.xlu0 %816
    %818 = vrot.lane.b32.xlu0 %v807, 96
    %v819 = vpop.permute.xlu0 %818
    %820 = vrot.lane.b32.xlu0 %v809, 96
    %v821 = vpop.permute.xlu0 %820
    %822 = vrot.lane.b32.xlu0 %v811, 96
    %v823 = vpop.permute.xlu0 %822
    %v828 = vmul.f32 %v784, %v817
    %v829 = vmul.f32 %v785, %v819
    %v830 = vmul.f32 %v786, %v821
    %v831 = vmul.f32 %v787, %v823
    %s832 = scalar_lea.vmem [#allocation6], 16
    %v833 = vld [vmem:[%s832] sm:$0xf]
    %v834 = vld [vmem:[%s832 + $0x4] sm:$0xf]
    %v835 = vld [vmem:[%s832 + $0x8] sm:$0xf]
    %v836 = vld [vmem:[%s832 + $0xc] sm:$0xf]
    %v837 = vpack.c.bf16 %v829, %v828
    %v838 = vpack.c.bf16 %v831, %v830
    %s839 = scalar_lea.vmem [#allocation7], 1
    %v840 = vld [vmem:[%s839] sm:$0x1]
    %v842 = vlaneseq
    %v843 = vshrl.u32 %v842, 7
    %v844 = vsub.s32 0, %v843
    %v845 = vrot.slane %v840, %v844
    %849 = vrot.lane.b32.xlu0 %v837, 64
    %v850 = vpop.permute.xlu0 %849
    %851 = vrot.lane.b32.xlu0 %v838, 64
    %v852 = vpop.permute.xlu0 %851
    %v857 = vunpack.c.l.b16 %v833
    %v858 = vunpack.c.l.b16 %v834
    %v859 = vunpack.c.l.b16 %v835
    %v860 = vunpack.c.l.b16 %v836
    %v861 = vpack.c.b16 %v858, %v857
    %v862 = vpack.c.b16 %v860, %v859
    %v866 = vsel %vm341, %v850, 0
    %v869 = vsel %vm341, %v852, 0
    %871 = vmatprep.subr.bf16.mxu0 0
    %872 = vmatpush1.bf16.msra.mxu0 %v861
    %873 = vmatprep.subr.bf16.mxu0 0
    %874 = vmatpush1.bf16.msra.mxu0 %v862
    %875 = vmatprep.subr.bf16.mxu0 0
    %876 = vmatpush1.bf16.msra.mxu0 0
    %877 = vmatprep.subr.bf16.mxu0 0
    %878 = vmatpush1.bf16.msra.mxu0 0
    %879 = vmatprep.subr.bf16.mxu0 0
    %880 = vmatpush1.bf16.msra.mxu0 0
    %881 = vmatprep.subr.bf16.mxu0 0
    %882 = vmatpush1.bf16.msra.mxu0 0
    %883 = vmatprep.subr.bf16.mxu0 0
    %884 = vmatpush1.bf16.msra.mxu0 0
    %885 = vmatprep.subr.bf16.mxu0 0
    %886 = vmatpush1.bf16.msra.mxu0 0
    %887 = vmatprep.subr.bf16.mxu0 0
    %888 = vmatpush1.bf16.msra.mxu0 0
    %889 = vmatprep.subr.bf16.mxu0 0
    %890 = vmatpush1.bf16.msra.mxu0 0
    %891 = vmatprep.subr.bf16.mxu0 0
    %892 = vmatpush1.bf16.msra.mxu0 0
    %893 = vmatprep.subr.bf16.mxu0 0
    %894 = vmatpush1.bf16.msra.mxu0 0
    %895 = vmatprep.subr.bf16.mxu0 0
    %896 = vmatpush1.bf16.msra.mxu0 0
    %897 = vmatprep.subr.bf16.mxu0 0
    %898 = vmatpush1.bf16.msra.mxu0 0
    %899 = vmatprep.subr.bf16.mxu0 0
    %900 = vmatpush1.bf16.msra.mxu0 0
    %901 = vmatprep.subr.bf16.mxu0 0
    %902 = vmatpush1.bf16.msra.mxu0 0
    %903 = vmatprep.mubr.bf16.mxu0 0
    %904 = vmatmul.mubr.bf16.gmra.mrb[0].mxu0 %v866
    %v905 = vpop.f32.mrb[0].mxu0
    %v906 = vadd.f32 %v845, %v905
    %v907 = vpop.f32.mrb[0].mxu0
    %v908 = vpop.f32.mrb[0].mxu0
    %v909 = vadd.f32 %v845, %v908
    %v910 = vpop.f32.mrb[0].mxu0
    %911 = vmatprep.mubr.bf16.mxu0 0
    %912 = vmatmul.mubr.bf16.gmra.mrb[0].mxu0 %v869
    %v913 = vpop.f32.mrb[0].mxu0
    %v914 = vadd.f32 %v845, %v913
    %v915 = vpop.f32.mrb[0].mxu0
    %v916 = vpop.f32.mrb[0].mxu0
    %v917 = vadd.f32 %v845, %v916
    %v918 = vpop.f32.mrb[0].mxu0
    %919 = vdwg.mxu0
    %v920 = vadd.f32 %v614, %v906
    %v921 = vadd.f32 %v615, %v909
    %v922 = vadd.f32 %v616, %v914
    %v923 = vadd.f32 %v617, %v917
    %v924 = vadd.f32 %v600, %v906
    %v925 = vadd.f32 %v603, %v909
    %v926 = vadd.f32 %v608, %v914
    %v927 = vadd.f32 %v611, %v917
    %s928 = scalar_lea.vmem %s3, 64
    %v929 = vld [vmem:[%s928] sm:$0xff]
    %v930 = vld [vmem:[%s928 + $0x8] sm:$0xff]
    %v931 = vld [vmem:[%s928 + $0x10] sm:$0xff]
    %v932 = vld [vmem:[%s928 + $0x18] sm:$0xff]
    %v933 = vpack.c.bf16 %v921, %v920
    %v934 = vpack.c.bf16 %v923, %v922
    %v939 = vunpack.c.l.b16 %v929
    %v940 = vunpack.c.h.b16 %v929
    %v941 = vunpack.c.l.b16 %v930
    %v942 = vunpack.c.h.b16 %v930
    %v943 = vunpack.c.l.b16 %v931
    %v944 = vunpack.c.h.b16 %v931
    %v945 = vunpack.c.l.b16 %v932
    %v946 = vunpack.c.h.b16 %v932
    %v947 = vpack.c.b16 %v941, %v939
    %v948 = vpack.c.b16 %v942, %v940
    %v949 = vpack.c.b16 %v945, %v943
    %v950 = vpack.c.b16 %v946, %v944
    %v956 = vsel %vm341, %v933, 0
    %v959 = vsel %vm341, %v934, 0
    %961 = vmatprep.subr.bf16.mxu0 %v948
    %962 = vmatpush1.bf16.msra.mxu0 %v947
    %963 = vmatprep.subr.bf16.mxu0 %v950
    %964 = vmatpush1.bf16.msra.mxu0 %v949
    %965 = vmatprep.subr.bf16.mxu0 0
    %966 = vmatpush1.bf16.msra.mxu0 0
    %967 = vmatprep.subr.bf16.mxu0 0
    %968 = vmatpush1.bf16.msra.mxu0 0
    %969 = vmatprep.subr.bf16.mxu0 0
    %970 = vmatpush1.bf16.msra.mxu0 0
    %971 = vmatprep.subr.bf16.mxu0 0
    %972 = vmatpush1.bf16.msra.mxu0 0
    %973 = vmatprep.subr.bf16.mxu0 0
    %974 = vmatpush1.bf16.msra.mxu0 0
    %975 = vmatprep.subr.bf16.mxu0 0
    %976 = vmatpush1.bf16.msra.mxu0 0
    %977 = vmatprep.subr.bf16.mxu0 0
    %978 = vmatpush1.bf16.msra.mxu0 0
    %979 = vmatprep.subr.bf16.mxu0 0
    %980 = vmatpush1.bf16.msra.mxu0 0
    %981 = vmatprep.subr.bf16.mxu0 0
    %982 = vmatpush1.bf16.msra.mxu0 0
    %983 = vmatprep.subr.bf16.mxu0 0
    %984 = vmatpush1.bf16.msra.mxu0 0
    %985 = vmatprep.subr.bf16.mxu0 0
    %986 = vmatpush1.bf16.msra.mxu0 0
    %987 = vmatprep.subr.bf16.mxu0 0
    %988 = vmatpush1.bf16.msra.mxu0 0
    %989 = vmatprep.subr.bf16.mxu0 0
    %990 = vmatpush1.bf16.msra.mxu0 0
    %991 = vmatprep.subr.bf16.mxu0 0
    %992 = vmatpush1.bf16.msra.mxu0 0
    %993 = vmatprep.mubr.bf16.mxu0 0
    %994 = vmatmul.mubr.bf16.gmra.mrb[0].mxu0 %v956
    %v995 = vpop.f32.mrb[0].mxu0
    %v996 = vadd.f32 0.0, %v995
    %v997 = vpop.f32.mrb[0].mxu0
    %v998 = vadd.f32 0.0, %v997
    %v999 = vpop.f32.mrb[0].mxu0
    %v1000 = vadd.f32 0.0, %v999
    %v1001 = vpop.f32.mrb[0].mxu0
    %v1002 = vadd.f32 0.0, %v1001
    %1003 = vmatprep.mubr.bf16.mxu0 0
    %1004 = vmatmul.mubr.bf16.gmra.mrb[0].mxu0 %v959
    %v1005 = vpop.f32.mrb[0].mxu0
    %v1006 = vadd.f32 0.0, %v1005
    %v1007 = vpop.f32.mrb[0].mxu0
    %v1008 = vadd.f32 0.0, %v1007
    %v1009 = vpop.f32.mrb[0].mxu0
    %v1010 = vadd.f32 0.0, %v1009
    %v1011 = vpop.f32.mrb[0].mxu0
    %v1012 = vadd.f32 0.0, %v1011
    %1013 = vdwg.mxu0
    %v1014 = vrot.slane %v996, 4
    %v1015 = vrot.slane %v1000, 4
    %v1016 = vrot.slane %v1006, 4
    %v1017 = vrot.slane %v1010, 4
    %vm1018 = vcmp.lt.s32.totalorder %v169, 4
    %v1019 = vsel %vm1018, %v1016, %v1017
    %v1020 = vsel %vm1018, %v1015, %v1016
    %v1021 = vsel %vm1018, %v1014, %v1015
    %v1022 = vsel %vm1018, %v1017, %v1014
    %v1023 = vrot.slane %v998, 4
    %v1024 = vrot.slane %v1002, 4
    %v1025 = vrot.slane %v1008, 4
    %v1026 = vrot.slane %v1012, 4
    %v1027 = vsel %vm1018, %v1025, %v1026
    %v1028 = vsel %vm1018, %v1024, %v1025
    %v1029 = vsel %vm1018, %v1023, %v1024
    %v1030 = vsel %vm1018, %v1026, %v1023
    %v1031 = vsel %vm237, %v1022, 0.0
    %v1032 = vsel %vm238, %v1021, 0.0
    %v1033 = vsel %vm239, %v1020, 0.0
    %v1034 = vsel %vm240, %v1019, 0.0
    %1039 = vrot.lane.b32.xlu0 %v1031, 64
    %v1040 = vpop.permute.xlu0 %1039
    %1041 = vrot.lane.b32.xlu0 %v1032, 64
    %v1042 = vpop.permute.xlu0 %1041
    %1043 = vrot.lane.b32.xlu0 %v1033, 64
    %v1044 = vpop.permute.xlu0 %1043
    %1045 = vrot.lane.b32.xlu0 %v1034, 64
    %v1046 = vpop.permute.xlu0 %1045
    %v1051 = vadd.f32 %v996, %v1040
    %v1052 = vadd.f32 %v1000, %v1042
    %v1053 = vadd.f32 %v1006, %v1044
    %v1054 = vadd.f32 %v1010, %v1046
    %v1055 = vsel %vm241, %v1029, 0.0
    %v1056 = vsel %vm242, %v1028, 0.0
    %v1057 = vsel %vm243, %v1027, 0.0
    %v1058 = vsel %vm244, %v1030, 0.0
    %1063 = vrot.lane.b32.xlu0 %v1055, 64
    %v1064 = vpop.permute.xlu0 %1063
    %1065 = vrot.lane.b32.xlu0 %v1056, 64
    %v1066 = vpop.permute.xlu0 %1065
    %1067 = vrot.lane.b32.xlu0 %v1057, 64
    %v1068 = vpop.permute.xlu0 %1067
    %1069 = vrot.lane.b32.xlu0 %v1058, 64
    %v1070 = vpop.permute.xlu0 %1069
    %v1075 = vadd.f32 %v1051, %v1064
    %v1076 = vadd.f32 %v1052, %v1066
    %v1077 = vadd.f32 %v1053, %v1068
    %v1078 = vadd.f32 %v1054, %v1070
    %s1079 = scalar_lea.vmem [#allocation4], 2
    %v1080 = vld [vmem:[%s1079] sm:$0x1]
    %v1082 = vlaneseq
    %v1083 = vshrl.u32 %v1082, 7
    %v1084 = vsub.s32 0, %v1083
    %v1085 = vrot.slane %v1080, %v1084
    %1086 = vrot.lane.b32.xlu0 %v1085, 64
    %v1087 = vpop.permute.xlu0 %1086
    %v1089 = vadd.f32 %v1075, %v1087
    %v1090 = vadd.f32 %v1076, %v1087
    %v1091 = vadd.f32 %v1077, %v1087
    %v1092 = vadd.f32 %v1078, %v1087
    %v1093 = vtanh.pop %v1089
    %v1094 = vtanh.pop %v1090
    %v1095 = vtanh.pop %v1091
    %v1096 = vtanh.pop %v1092
    %v1097 = vxor.u32 %v1089, 2147483648
    %v1098 = vxor.u32 %v1090, 2147483648
    %v1099 = vxor.u32 %v1091, 2147483648
    %v1100 = vxor.u32 %v1092, 2147483648
    %v1101 = vmul.f32 %v1097, 1.442695
    %v1102 = vpow.pop %v1101
    %v1103 = vmul.f32 %v1098, 1.442695
    %v1104 = vpow.pop %v1103
    %v1105 = vmul.f32 %v1099, 1.442695
    %v1106 = vpow.pop %v1105
    %v1107 = vmul.f32 %v1100, 1.442695
    %v1108 = vpow.pop %v1107
    %v1109 = vadd.f32 %v1102, 1.0
    %v1110 = vadd.f32 %v1104, 1.0
    %v1111 = vadd.f32 %v1106, 1.0
    %v1112 = vadd.f32 %v1108, 1.0
    %v1113 = vrcp.pop %v1109
    %v1114 = vmul.f32 1.0, %v1113
    %v1115 = vrcp.pop %v1110
    %v1116 = vmul.f32 1.0, %v1115
    %v1117 = vrcp.pop %v1111
    %v1118 = vmul.f32 1.0, %v1117
    %v1119 = vrcp.pop %v1112
    %v1120 = vmul.f32 1.0, %v1119
    %1125 = vrot.lane.b32.xlu0 %v1114, 96
    %v1126 = vpop.permute.xlu0 %1125
    %1127 = vrot.lane.b32.xlu0 %v1116, 96
    %v1128 = vpop.permute.xlu0 %1127
    %1129 = vrot.lane.b32.xlu0 %v1118, 96
    %v1130 = vpop.permute.xlu0 %1129
    %1131 = vrot.lane.b32.xlu0 %v1120, 96
    %v1132 = vpop.permute.xlu0 %1131
    %v1137 = vmul.f32 %v1093, %v1126
    %v1138 = vmul.f32 %v1094, %v1128
    %v1139 = vmul.f32 %v1095, %v1130
    %v1140 = vmul.f32 %v1096, %v1132
    %s1141 = scalar_lea.vmem [#allocation6], 32
    %v1142 = vld [vmem:[%s1141] sm:$0xf]
    %v1143 = vld [vmem:[%s1141 + $0x4] sm:$0xf]
    %v1144 = vld [vmem:[%s1141 + $0x8] sm:$0xf]
    %v1145 = vld [vmem:[%s1141 + $0xc] sm:$0xf]
    %v1146 = vpack.c.bf16 %v1138, %v1137
    %v1147 = vpack.c.bf16 %v1140, %v1139
    %s1148 = scalar_lea.vmem [#allocation7], 2
    %v1149 = vld [vmem:[%s1148] sm:$0x1]
    %v1151 = vlaneseq
    %v1152 = vshrl.u32 %v1151, 7
    %v1153 = vsub.s32 0, %v1152
    %v1154 = vrot.slane %v1149, %v1153
    %1158 = vrot.lane.b32.xlu0 %v1146, 64
    %v1159 = vpop.permute.xlu0 %1158
    %1160 = vrot.lane.b32.xlu0 %v1147, 64
    %v1161 = vpop.permute.xlu0 %1160
    %v1166 = vunpack.c.l.b16 %v1142
    %v1167 = vunpack.c.l.b16 %v1143
    %v1168 = vunpack.c.l.b16 %v1144
    %v1169 = vunpack.c.l.b16 %v1145
    %v1170 = vpack.c.b16 %v1167, %v1166
    %v1171 = vpack.c.b16 %v1169, %v1168
    %v1175 = vsel %vm341, %v1159, 0
    %v1178 = vsel %vm341, %v1161, 0
    %1180 = vmatprep.subr.bf16.mxu0 0
    %1181 = vmatpush1.bf16.msra.mxu0 %v1170
    %1182 = vmatprep.subr.bf16.mxu0 0
    %1183 = vmatpush1.bf16.msra.mxu0 %v1171
    %1184 = vmatprep.subr.bf16.mxu0 0
    %1185 = vmatpush1.bf16.msra.mxu0 0
    %1186 = vmatprep.subr.bf16.mxu0 0
    %1187 = vmatpush1.bf16.msra.mxu0 0
    %1188 = vmatprep.subr.bf16.mxu0 0
    %1189 = vmatpush1.bf16.msra.mxu0 0
    %1190 = vmatprep.subr.bf16.mxu0 0
    %1191 = vmatpush1.bf16.msra.mxu0 0
    %1192 = vmatprep.subr.bf16.mxu0 0
    %1193 = vmatpush1.bf16.msra.mxu0 0
    %1194 = vmatprep.subr.bf16.mxu0 0
    %1195 = vmatpush1.bf16.msra.mxu0 0
    %1196 = vmatprep.subr.bf16.mxu0 0
    %1197 = vmatpush1.bf16.msra.mxu0 0
    %1198 = vmatprep.subr.bf16.mxu0 0
    %1199 = vmatpush1.bf16.msra.mxu0 0
    %1200 = vmatprep.subr.bf16.mxu0 0
    %1201 = vmatpush1.bf16.msra.mxu0 0
    %1202 = vmatprep.subr.bf16.mxu0 0
    %1203 = vmatpush1.bf16.msra.mxu0 0
    %1204 = vmatprep.subr.bf16.mxu0 0
    %1205 = vmatpush1.bf16.msra.mxu0 0
    %1206 = vmatprep.subr.bf16.mxu0 0
    %1207 = vmatpush1.bf16.msra.mxu0 0
    %1208 = vmatprep.subr.bf16.mxu0 0
    %1209 = vmatpush1.bf16.msra.mxu0 0
    %1210 = vmatprep.subr.bf16.mxu0 0
    %1211 = vmatpush1.bf16.msra.mxu0 0
    %1212 = vmatprep.mubr.bf16.mxu0 0
    %1213 = vmatmul.mubr.bf16.gmra.mrb[0].mxu0 %v1175
    %v1214 = vpop.f32.mrb[0].mxu0
    %v1215 = vadd.f32 %v1154, %v1214
    %v1216 = vpop.f32.mrb[0].mxu0
    %v1217 = vpop.f32.mrb[0].mxu0
    %v1218 = vadd.f32 %v1154, %v1217
    %v1219 = vpop.f32.mrb[0].mxu0
    %1220 = vmatprep.mubr.bf16.mxu0 0
    %1221 = vmatmul.mubr.bf16.gmra.mrb[0].mxu0 %v1178
    %v1222 = vpop.f32.mrb[0].mxu0
    %v1223 = vadd.f32 %v1154, %v1222
    %v1224 = vpop.f32.mrb[0].mxu0
    %v1225 = vpop.f32.mrb[0].mxu0
    %v1226 = vadd.f32 %v1154, %v1225
    %v1227 = vpop.f32.mrb[0].mxu0
    %1228 = vdwg.mxu0
    %v1229 = vadd.f32 %v924, %v1215
    %v1230 = vadd.f32 %v925, %v1218
    %v1231 = vadd.f32 %v926, %v1223
    %v1232 = vadd.f32 %v927, %v1226
    %v1233 = vld [vmem:[#allocation9] sm:$0xff]
    %v1234 = vld [vmem:[#allocation9 + $0x8] sm:$0xff]
    %v1235 = vld [vmem:[#allocation9 + $0x10] sm:$0xff]
    %v1236 = vld [vmem:[#allocation9 + $0x18] sm:$0xff]
    %v1241 = vunpack.c.l.b16 %v1233
    %v1242 = vunpack.c.h.b16 %v1233
    %v1243 = vunpack.c.l.b16 %v1234
    %v1244 = vunpack.c.h.b16 %v1234
    %v1245 = vunpack.c.l.b16 %v1235
    %v1246 = vunpack.c.h.b16 %v1235
    %v1247 = vunpack.c.l.b16 %v1236
    %v1248 = vunpack.c.h.b16 %v1236
    %v1249 = vpack.c.b16 %v1243, %v1241
    %v1250 = vpack.c.b16 %v1244, %v1242
    %v1251 = vpack.c.b16 %v1247, %v1245
    %v1252 = vpack.c.b16 %v1248, %v1246
    %1257 = vmatprep.subr.bf16.mxu0 %v1250
    %1258 = vmatpush1.bf16.msra.mxu0 %v1249
    %1259 = vmatprep.subr.bf16.mxu0 %v1252
    %1260 = vmatpush1.bf16.msra.mxu0 %v1251
    %1261 = vmatprep.subr.bf16.mxu0 0
    %1262 = vmatpush1.bf16.msra.mxu0 0
    %1263 = vmatprep.subr.bf16.mxu0 0
    %1264 = vmatpush1.bf16.msra.mxu0 0
    %1265 = vmatprep.subr.bf16.mxu0 0
    %1266 = vmatpush1.bf16.msra.mxu0 0
    %1267 = vmatprep.subr.bf16.mxu0 0
    %1268 = vmatpush1.bf16.msra.mxu0 0
    %1269 = vmatprep.subr.bf16.mxu0 0
    %1270 = vmatpush1.bf16.msra.mxu0 0
    %1271 = vmatprep.subr.bf16.mxu0 0
    %1272 = vmatpush1.bf16.msra.mxu0 0
    %1273 = vmatprep.subr.bf16.mxu0 0
    %1274 = vmatpush1.bf16.msra.mxu0 0
    %1275 = vmatprep.subr.bf16.mxu0 0
    %1276 = vmatpush1.bf16.msra.mxu0 0
    %1277 = vmatprep.subr.bf16.mxu0 0
    %1278 = vmatpush1.bf16.msra.mxu0 0
    %1279 = vmatprep.subr.bf16.mxu0 0
    %1280 = vmatpush1.bf16.msra.mxu0 0
    %1281 = vmatprep.subr.bf16.mxu0 0
    %1282 = vmatpush1.bf16.msra.mxu0 0
    %1283 = vmatprep.subr.bf16.mxu0 0
    %1284 = vmatpush1.bf16.msra.mxu0 0
    %1285 = vmatprep.subr.bf16.mxu0 0
    %1286 = vmatpush1.bf16.msra.mxu0 0
    %1287 = vmatprep.subr.bf16.mxu0 0
    %1288 = vmatpush1.bf16.msra.mxu0 0
    %1289 = vmatprep.mubr.bf16.mxu0 0
    %1290 = vmatmul.mubr.bf16.gmra.mrb[0].mxu0 %v343
    %v1291 = vpop.f32.mrb[0].mxu0
    %v1292 = vadd.f32 0.0, %v1291
    %v1293 = vpop.f32.mrb[0].mxu0
    %v1294 = vadd.f32 0.0, %v1293
    %v1295 = vpop.f32.mrb[0].mxu0
    %v1296 = vadd.f32 0.0, %v1295
    %v1297 = vpop.f32.mrb[0].mxu0
    %v1298 = vadd.f32 0.0, %v1297
    %1299 = vmatprep.mubr.bf16.mxu0 0
    %1300 = vmatmul.mubr.bf16.gmra.mrb[0].mxu0 %v346
    %v1301 = vpop.f32.mrb[0].mxu0
    %v1302 = vadd.f32 0.0, %v1301
    %v1303 = vpop.f32.mrb[0].mxu0
    %v1304 = vadd.f32 0.0, %v1303
    %v1305 = vpop.f32.mrb[0].mxu0
    %v1306 = vadd.f32 0.0, %v1305
    %v1307 = vpop.f32.mrb[0].mxu0
    %v1308 = vadd.f32 0.0, %v1307
    %1309 = vdwg.mxu0
    %v1310 = vrot.slane %v1292, 7
    %v1311 = vrot.slane %v1296, 7
    %v1312 = vrot.slane %v1302, 7
    %v1313 = vrot.slane %v1306, 7
    %v1314 = vsel %vm405, %v1312, %v1313
    %v1315 = vsel %vm405, %v1311, %v1312
    %v1316 = vsel %vm405, %v1310, %v1311
    %v1317 = vsel %vm405, %v1313, %v1310
    %v1318 = vrot.slane %v1294, 1
    %v1319 = vrot.slane %v1298, 1
    %v1320 = vrot.slane %v1304, 1
    %v1321 = vrot.slane %v1308, 1
    %v1322 = vsel %vm414, %v1320, %v1321
    %v1323 = vsel %vm414, %v1319, %v1320
    %v1324 = vsel %vm414, %v1318, %v1319
    %v1325 = vsel %vm414, %v1321, %v1318
    %v1326 = vsel %vm221, %v1317, 0.0
    %v1327 = vsel %vm222, %v1316, 0.0
    %v1328 = vsel %vm223, %v1315, 0.0
    %v1329 = vsel %vm224, %v1314, 0.0
    %1334 = vrot.lane.b32.xlu0 %v1326, 64
    %v1335 = vpop.permute.xlu0 %1334
    %1336 = vrot.lane.b32.xlu0 %v1327, 64
    %v1337 = vpop.permute.xlu0 %1336
    %1338 = vrot.lane.b32.xlu0 %v1328, 64
    %v1339 = vpop.permute.xlu0 %1338
    %1340 = vrot.lane.b32.xlu0 %v1329, 64
    %v1341 = vpop.permute.xlu0 %1340
    %v1346 = vadd.f32 %v1292, %v1335
    %v1347 = vadd.f32 %v1296, %v1337
    %v1348 = vadd.f32 %v1302, %v1339
    %v1349 = vadd.f32 %v1306, %v1341
    %v1350 = vsel %vm225, %v1324, 0.0
    %v1351 = vsel %vm226, %v1323, 0.0
    %v1352 = vsel %vm227, %v1322, 0.0
    %v1353 = vsel %vm228, %v1325, 0.0
    %1358 = vrot.lane.b32.xlu0 %v1350, 64
    %v1359 = vpop.permute.xlu0 %1358
    %1360 = vrot.lane.b32.xlu0 %v1351, 64
    %v1361 = vpop.permute.xlu0 %1360
    %1362 = vrot.lane.b32.xlu0 %v1352, 64
    %v1363 = vpop.permute.xlu0 %1362
    %1364 = vrot.lane.b32.xlu0 %v1353, 64
    %v1365 = vpop.permute.xlu0 %1364
    %v1370 = vadd.f32 %v1346, %v1359
    %v1371 = vadd.f32 %v1347, %v1361
    %v1372 = vadd.f32 %v1348, %v1363
    %v1373 = vadd.f32 %v1349, %v1365
    %v1374 = vld [vmem:[#allocation10] sm:$0x1]
    %v1376 = vlaneseq
    %v1377 = vshrl.u32 %v1376, 7
    %v1378 = vsub.s32 0, %v1377
    %v1379 = vrot.slane %v1374, %v1378
    %1380 = vrot.lane.b32.xlu0 %v1379, 64
    %v1381 = vpop.permute.xlu0 %1380
    %v1383 = vadd.f32 %v1370, %v1381
    %v1384 = vadd.f32 %v1371, %v1381
    %v1385 = vadd.f32 %v1372, %v1381
    %v1386 = vadd.f32 %v1373, %v1381
    %v1387 = vtanh.pop %v1383
    %v1388 = vtanh.pop %v1384
    %v1389 = vtanh.pop %v1385
    %v1390 = vtanh.pop %v1386
    %v1391 = vxor.u32 %v1383, 2147483648
    %v1392 = vxor.u32 %v1384, 2147483648
    %v1393 = vxor.u32 %v1385, 2147483648
    %v1394 = vxor.u32 %v1386, 2147483648
    %v1395 = vmul.f32 %v1391, 1.442695
    %v1396 = vpow.pop %v1395
    %v1397 = vmul.f32 %v1392, 1.442695
    %v1398 = vpow.pop %v1397
    %v1399 = vmul.f32 %v1393, 1.442695
    %v1400 = vpow.pop %v1399
    %v1401 = vmul.f32 %v1394, 1.442695
    %v1402 = vpow.pop %v1401
    %v1403 = vadd.f32 %v1396, 1.0
    %v1404 = vadd.f32 %v1398, 1.0
    %v1405 = vadd.f32 %v1400, 1.0
    %v1406 = vadd.f32 %v1402, 1.0
    %v1407 = vrcp.pop %v1403
    %v1408 = vmul.f32 1.0, %v1407
    %v1409 = vrcp.pop %v1404
    %v1410 = vmul.f32 1.0, %v1409
    %v1411 = vrcp.pop %v1405
    %v1412 = vmul.f32 1.0, %v1411
    %v1413 = vrcp.pop %v1406
    %v1414 = vmul.f32 1.0, %v1413
    %1419 = vrot.lane.b32.xlu0 %v1408, 96
    %v1420 = vpop.permute.xlu0 %1419
    %1421 = vrot.lane.b32.xlu0 %v1410, 96
    %v1422 = vpop.permute.xlu0 %1421
    %1423 = vrot.lane.b32.xlu0 %v1412, 96
    %v1424 = vpop.permute.xlu0 %1423
    %1425 = vrot.lane.b32.xlu0 %v1414, 96
    %v1426 = vpop.permute.xlu0 %1425
    %v1431 = vmul.f32 %v1387, %v1420
    %v1432 = vmul.f32 %v1388, %v1422
    %v1433 = vmul.f32 %v1389, %v1424
    %v1434 = vmul.f32 %v1390, %v1426
    %v1435 = vld [vmem:[#allocation12] sm:$0xf]
    %v1436 = vld [vmem:[#allocation12 + $0x4] sm:$0xf]
    %v1437 = vld [vmem:[#allocation12 + $0x8] sm:$0xf]
    %v1438 = vld [vmem:[#allocation12 + $0xc] sm:$0xf]
    %v1439 = vpack.c.bf16 %v1432, %v1431
    %v1440 = vpack.c.bf16 %v1434, %v1433
    %v1441 = vld [vmem:[#allocation13] sm:$0x1]
    %v1443 = vlaneseq
    %v1444 = vshrl.u32 %v1443, 7
    %v1445 = vsub.s32 0, %v1444
    %v1446 = vrot.slane %v1441, %v1445
    %1450 = vrot.lane.b32.xlu0 %v1439, 64
    %v1451 = vpop.permute.xlu0 %1450
    %1452 = vrot.lane.b32.xlu0 %v1440, 64
    %v1453 = vpop.permute.xlu0 %1452
    %v1458 = vunpack.c.l.b16 %v1435
    %v1459 = vunpack.c.l.b16 %v1436
    %v1460 = vunpack.c.l.b16 %v1437
    %v1461 = vunpack.c.l.b16 %v1438
    %v1462 = vpack.c.b16 %v1459, %v1458
    %v1463 = vpack.c.b16 %v1461, %v1460
    %v1467 = vsel %vm341, %v1451, 0
    %v1470 = vsel %vm341, %v1453, 0
    %1472 = vmatprep.subr.bf16.mxu0 0
    %1473 = vmatpush1.bf16.msra.mxu0 %v1462
    %1474 = vmatprep.subr.bf16.mxu0 0
    %1475 = vmatpush1.bf16.msra.mxu0 %v1463
    %1476 = vmatprep.subr.bf16.mxu0 0
    %1477 = vmatpush1.bf16.msra.mxu0 0
    %1478 = vmatprep.subr.bf16.mxu0 0
    %1479 = vmatpush1.bf16.msra.mxu0 0
    %1480 = vmatprep.subr.bf16.mxu0 0
    %1481 = vmatpush1.bf16.msra.mxu0 0
    %1482 = vmatprep.subr.bf16.mxu0 0
    %1483 = vmatpush1.bf16.msra.mxu0 0
    %1484 = vmatprep.subr.bf16.mxu0 0
    %1485 = vmatpush1.bf16.msra.mxu0 0
    %1486 = vmatprep.subr.bf16.mxu0 0
    %1487 = vmatpush1.bf16.msra.mxu0 0
    %1488 = vmatprep.subr.bf16.mxu0 0
    %1489 = vmatpush1.bf16.msra.mxu0 0
    %1490 = vmatprep.subr.bf16.mxu0 0
    %1491 = vmatpush1.bf16.msra.mxu0 0
    %1492 = vmatprep.subr.bf16.mxu0 0
    %1493 = vmatpush1.bf16.msra.mxu0 0
    %1494 = vmatprep.subr.bf16.mxu0 0
    %1495 = vmatpush1.bf16.msra.mxu0 0
    %1496 = vmatprep.subr.bf16.mxu0 0
    %1497 = vmatpush1.bf16.msra.mxu0 0
    %1498 = vmatprep.subr.bf16.mxu0 0
    %1499 = vmatpush1.bf16.msra.mxu0 0
    %1500 = vmatprep.subr.bf16.mxu0 0
    %1501 = vmatpush1.bf16.msra.mxu0 0
    %1502 = vmatprep.subr.bf16.mxu0 0
    %1503 = vmatpush1.bf16.msra.mxu0 0
    %1504 = vmatprep.mubr.bf16.mxu0 0
    %1505 = vmatmul.mubr.bf16.gmra.mrb[0].mxu0 %v1467
    %v1506 = vpop.f32.mrb[0].mxu0
    %v1507 = vadd.f32 %v1446, %v1506
    %v1508 = vpop.f32.mrb[0].mxu0
    %v1509 = vpop.f32.mrb[0].mxu0
    %v1510 = vadd.f32 %v1446, %v1509
    %v1511 = vpop.f32.mrb[0].mxu0
    %1512 = vmatprep.mubr.bf16.mxu0 0
    %1513 = vmatmul.mubr.bf16.gmra.mrb[0].mxu0 %v1470
    %v1514 = vpop.f32.mrb[0].mxu0
    %v1515 = vadd.f32 %v1446, %v1514
    %v1516 = vpop.f32.mrb[0].mxu0
    %v1517 = vpop.f32.mrb[0].mxu0
    %v1518 = vadd.f32 %v1446, %v1517
    %v1519 = vpop.f32.mrb[0].mxu0
    %1520 = vdwg.mxu0
    %v1521 = vadd.f32 %v301, %v1507
    %v1522 = vadd.f32 %v304, %v1510
    %v1523 = vadd.f32 %v309, %v1515
    %v1524 = vadd.f32 %v312, %v1518
    %s1525 = scalar_lea.vmem [#allocation9], 32
    %v1526 = vld [vmem:[%s1525] sm:$0xff]
    %v1527 = vld [vmem:[%s1525 + $0x8] sm:$0xff]
    %v1528 = vld [vmem:[%s1525 + $0x10] sm:$0xff]
    %v1529 = vld [vmem:[%s1525 + $0x18] sm:$0xff]
    %v1530 = vpack.c.bf16 %v1522, %v1521
    %v1531 = vpack.c.bf16 %v1524, %v1523
    %v1536 = vunpack.c.l.b16 %v1526
    %v1537 = vunpack.c.h.b16 %v1526
    %v1538 = vunpack.c.l.b16 %v1527
    %v1539 = vunpack.c.h.b16 %v1527
    %v1540 = vunpack.c.l.b16 %v1528
    %v1541 = vunpack.c.h.b16 %v1528
    %v1542 = vunpack.c.l.b16 %v1529
    %v1543 = vunpack.c.h.b16 %v1529
    %v1544 = vpack.c.b16 %v1538, %v1536
    %v1545 = vpack.c.b16 %v1539, %v1537
    %v1546 = vpack.c.b16 %v1542, %v1540
    %v1547 = vpack.c.b16 %v1543, %v1541
    %v1553 = vsel %vm341, %v1530, 0
    %v1556 = vsel %vm341, %v1531, 0
    %1558 = vmatprep.subr.bf16.mxu0 %v1545
    %1559 = vmatpush1.bf16.msra.mxu0 %v1544
    %1560 = vmatprep.subr.bf16.mxu0 %v1547
    %1561 = vmatpush1.bf16.msra.mxu0 %v1546
    %1562 = vmatprep.subr.bf16.mxu0 0
    %1563 = vmatpush1.bf16.msra.mxu0 0
    %1564 = vmatprep.subr.bf16.mxu0 0
    %1565 = vmatpush1.bf16.msra.mxu0 0
    %1566 = vmatprep.subr.bf16.mxu0 0
    %1567 = vmatpush1.bf16.msra.mxu0 0
    %1568 = vmatprep.subr.bf16.mxu0 0
    %1569 = vmatpush1.bf16.msra.mxu0 0
    %1570 = vmatprep.subr.bf16.mxu0 0
    %1571 = vmatpush1.bf16.msra.mxu0 0
    %1572 = vmatprep.subr.bf16.mxu0 0
    %1573 = vmatpush1.bf16.msra.mxu0 0
    %1574 = vmatprep.subr.bf16.mxu0 0
    %1575 = vmatpush1.bf16.msra.mxu0 0
    %1576 = vmatprep.subr.bf16.mxu0 0
    %1577 = vmatpush1.bf16.msra.mxu0 0
    %1578 = vmatprep.subr.bf16.mxu0 0
    %1579 = vmatpush1.bf16.msra.mxu0 0
    %1580 = vmatprep.subr.bf16.mxu0 0
    %1581 = vmatpush1.bf16.msra.mxu0 0
    %1582 = vmatprep.subr.bf16.mxu0 0
    %1583 = vmatpush1.bf16.msra.mxu0 0
    %1584 = vmatprep.subr.bf16.mxu0 0
    %1585 = vmatpush1.bf16.msra.mxu0 0
    %1586 = vmatprep.subr.bf16.mxu0 0
    %1587 = vmatpush1.bf16.msra.mxu0 0
    %1588 = vmatprep.subr.bf16.mxu0 0
    %1589 = vmatpush1.bf16.msra.mxu0 0
    %1590 = vmatprep.mubr.bf16.mxu0 0
    %1591 = vmatmul.mubr.bf16.gmra.mrb[0].mxu0 %v1553
    %v1592 = vpop.f32.mrb[0].mxu0
    %v1593 = vadd.f32 0.0, %v1592
    %v1594 = vpop.f32.mrb[0].mxu0
    %v1595 = vadd.f32 0.0, %v1594
    %v1596 = vpop.f32.mrb[0].mxu0
    %v1597 = vadd.f32 0.0, %v1596
    %v1598 = vpop.f32.mrb[0].mxu0
    %v1599 = vadd.f32 0.0, %v1598
    %1600 = vmatprep.mubr.bf16.mxu0 0
    %1601 = vmatmul.mubr.bf16.gmra.mrb[0].mxu0 %v1556
    %v1602 = vpop.f32.mrb[0].mxu0
    %v1603 = vadd.f32 0.0, %v1602
    %v1604 = vpop.f32.mrb[0].mxu0
    %v1605 = vadd.f32 0.0, %v1604
    %v1606 = vpop.f32.mrb[0].mxu0
    %v1607 = vadd.f32 0.0, %v1606
    %v1608 = vpop.f32.mrb[0].mxu0
    %v1609 = vadd.f32 0.0, %v1608
    %1610 = vdwg.mxu0
    %v1611 = vrot.slane %v1593, 6
    %v1612 = vrot.slane %v1597, 6
    %v1613 = vrot.slane %v1603, 6
    %v1614 = vrot.slane %v1607, 6
    %v1615 = vsel %vm708, %v1613, %v1614
    %v1616 = vsel %vm708, %v1612, %v1613
    %v1617 = vsel %vm708, %v1611, %v1612
    %v1618 = vsel %vm708, %v1614, %v1611
    %v1619 = vrot.slane %v1595, 2
    %v1620 = vrot.slane %v1599, 2
    %v1621 = vrot.slane %v1605, 2
    %v1622 = vrot.slane %v1609, 2
    %v1623 = vsel %vm717, %v1621, %v1622
    %v1624 = vsel %vm717, %v1620, %v1621
    %v1625 = vsel %vm717, %v1619, %v1620
    %v1626 = vsel %vm717, %v1622, %v1619
    %v1627 = vsel %vm229, %v1618, 0.0
    %v1628 = vsel %vm230, %v1617, 0.0
    %v1629 = vsel %vm231, %v1616, 0.0
    %v1630 = vsel %vm232, %v1615, 0.0
    %1635 = vrot.lane.b32.xlu0 %v1627, 64
    %v1636 = vpop.permute.xlu0 %1635
    %1637 = vrot.lane.b32.xlu0 %v1628, 64
    %v1638 = vpop.permute.xlu0 %1637
    %1639 = vrot.lane.b32.xlu0 %v1629, 64
    %v1640 = vpop.permute.xlu0 %1639
    %1641 = vrot.lane.b32.xlu0 %v1630, 64
    %v1642 = vpop.permute.xlu0 %1641
    %v1647 = vadd.f32 %v1593, %v1636
    %v1648 = vadd.f32 %v1597, %v1638
    %v1649 = vadd.f32 %v1603, %v1640
    %v1650 = vadd.f32 %v1607, %v1642
    %v1651 = vsel %vm233, %v1625, 0.0
    %v1652 = vsel %vm234, %v1624, 0.0
    %v1653 = vsel %vm235, %v1623, 0.0
    %v1654 = vsel %vm236, %v1626, 0.0
    %1659 = vrot.lane.b32.xlu0 %v1651, 64
    %v1660 = vpop.permute.xlu0 %1659
    %1661 = vrot.lane.b32.xlu0 %v1652, 64
    %v1662 = vpop.permute.xlu0 %1661
    %1663 = vrot.lane.b32.xlu0 %v1653, 64
    %v1664 = vpop.permute.xlu0 %1663
    %1665 = vrot.lane.b32.xlu0 %v1654, 64
    %v1666 = vpop.permute.xlu0 %1665
    %v1671 = vadd.f32 %v1647, %v1660
    %v1672 = vadd.f32 %v1648, %v1662
    %v1673 = vadd.f32 %v1649, %v1664
    %v1674 = vadd.f32 %v1650, %v1666
    %s1675 = scalar_lea.vmem [#allocation10], 1
    %v1676 = vld [vmem:[%s1675] sm:$0x1]
    %v1678 = vlaneseq
    %v1679 = vshrl.u32 %v1678, 7
    %v1680 = vsub.s32 0, %v1679
    %v1681 = vrot.slane %v1676, %v1680
    %1682 = vrot.lane.b32.xlu0 %v1681, 64
    %v1683 = vpop.permute.xlu0 %1682
    %v1685 = vadd.f32 %v1671, %v1683
    %v1686 = vadd.f32 %v1672, %v1683
    %v1687 = vadd.f32 %v1673, %v1683
    %v1688 = vadd.f32 %v1674, %v1683
    %v1689 = vtanh.pop %v1685
    %v1690 = vtanh.pop %v1686
    %v1691 = vtanh.pop %v1687
    %v1692 = vtanh.pop %v1688
    %v1693 = vxor.u32 %v1685, 2147483648
    %v1694 = vxor.u32 %v1686, 2147483648
    %v1695 = vxor.u32 %v1687, 2147483648
    %v1696 = vxor.u32 %v1688, 2147483648
    %v1697 = vmul.f32 %v1693, 1.442695
    %v1698 = vpow.pop %v1697
    %v1699 = vmul.f32 %v1694, 1.442695
    %v1700 = vpow.pop %v1699
    %v1701 = vmul.f32 %v1695, 1.442695
    %v1702 = vpow.pop %v1701
    %v1703 = vmul.f32 %v1696, 1.442695
    %v1704 = vpow.pop %v1703
    %v1705 = vadd.f32 %v1698, 1.0
    %v1706 = vadd.f32 %v1700, 1.0
    %v1707 = vadd.f32 %v1702, 1.0
    %v1708 = vadd.f32 %v1704, 1.0
    %v1709 = vrcp.pop %v1705
    %v1710 = vmul.f32 1.0, %v1709
    %v1711 = vrcp.pop %v1706
    %v1712 = vmul.f32 1.0, %v1711
    %v1713 = vrcp.pop %v1707
    %v1714 = vmul.f32 1.0, %v1713
    %v1715 = vrcp.pop %v1708
    %v1716 = vmul.f32 1.0, %v1715
    %1721 = vrot.lane.b32.xlu0 %v1710, 96
    %v1722 = vpop.permute.xlu0 %1721
    %1723 = vrot.lane.b32.xlu0 %v1712, 96
    %v1724 = vpop.permute.xlu0 %1723
    %1725 = vrot.lane.b32.xlu0 %v1714, 96
    %v1726 = vpop.permute.xlu0 %1725
    %1727 = vrot.lane.b32.xlu0 %v1716, 96
    %v1728 = vpop.permute.xlu0 %1727
    %v1733 = vmul.f32 %v1689, %v1722
    %v1734 = vmul.f32 %v1690, %v1724
    %v1735 = vmul.f32 %v1691, %v1726
    %v1736 = vmul.f32 %v1692, %v1728
    %s1737 = scalar_lea.vmem [#allocation12], 16
    %v1738 = vld [vmem:[%s1737] sm:$0xf]
    %v1739 = vld [vmem:[%s1737 + $0x4] sm:$0xf]
    %v1740 = vld [vmem:[%s1737 + $0x8] sm:$0xf]
    %v1741 = vld [vmem:[%s1737 + $0xc] sm:$0xf]
    %v1742 = vpack.c.bf16 %v1734, %v1733
    %v1743 = vpack.c.bf16 %v1736, %v1735
    %s1744 = scalar_lea.vmem [#allocation13], 1
    %v1745 = vld [vmem:[%s1744] sm:$0x1]
    %v1747 = vlaneseq
    %v1748 = vshrl.u32 %v1747, 7
    %v1749 = vsub.s32 0, %v1748
    %v1750 = vrot.slane %v1745, %v1749
    %1754 = vrot.lane.b32.xlu0 %v1742, 64
    %v1755 = vpop.permute.xlu0 %1754
    %1756 = vrot.lane.b32.xlu0 %v1743, 64
    %v1757 = vpop.permute.xlu0 %1756
    %v1762 = vunpack.c.l.b16 %v1738
    %v1763 = vunpack.c.l.b16 %v1739
    %v1764 = vunpack.c.l.b16 %v1740
    %v1765 = vunpack.c.l.b16 %v1741
    %v1766 = vpack.c.b16 %v1763, %v1762
    %v1767 = vpack.c.b16 %v1765, %v1764
    %v1771 = vsel %vm341, %v1755, 0
    %v1774 = vsel %vm341, %v1757, 0
    %1776 = vmatprep.subr.bf16.mxu0 0
    %1777 = vmatpush1.bf16.msra.mxu0 %v1766
    %1778 = vmatprep.subr.bf16.mxu0 0
    %1779 = vmatpush1.bf16.msra.mxu0 %v1767
    %1780 = vmatprep.subr.bf16.mxu0 0
    %1781 = vmatpush1.bf16.msra.mxu0 0
    %1782 = vmatprep.subr.bf16.mxu0 0
    %1783 = vmatpush1.bf16.msra.mxu0 0
    %1784 = vmatprep.subr.bf16.mxu0 0
    %1785 = vmatpush1.bf16.msra.mxu0 0
    %1786 = vmatprep.subr.bf16.mxu0 0
    %1787 = vmatpush1.bf16.msra.mxu0 0
    %1788 = vmatprep.subr.bf16.mxu0 0
    %1789 = vmatpush1.bf16.msra.mxu0 0
    %1790 = vmatprep.subr.bf16.mxu0 0
    %1791 = vmatpush1.bf16.msra.mxu0 0
    %1792 = vmatprep.subr.bf16.mxu0 0
    %1793 = vmatpush1.bf16.msra.mxu0 0
    %1794 = vmatprep.subr.bf16.mxu0 0
    %1795 = vmatpush1.bf16.msra.mxu0 0
    %1796 = vmatprep.subr.bf16.mxu0 0
    %1797 = vmatpush1.bf16.msra.mxu0 0
    %1798 = vmatprep.subr.bf16.mxu0 0
    %1799 = vmatpush1.bf16.msra.mxu0 0
    %1800 = vmatprep.subr.bf16.mxu0 0
    %1801 = vmatpush1.bf16.msra.mxu0 0
    %1802 = vmatprep.subr.bf16.mxu0 0
    %1803 = vmatpush1.bf16.msra.mxu0 0
    %1804 = vmatprep.subr.bf16.mxu0 0
    %1805 = vmatpush1.bf16.msra.mxu0 0
    %1806 = vmatprep.subr.bf16.mxu0 0
    %1807 = vmatpush1.bf16.msra.mxu0 0
    %1808 = vmatprep.mubr.bf16.mxu0 0
    %1809 = vmatmul.mubr.bf16.gmra.mrb[0].mxu0 %v1771
    %v1810 = vpop.f32.mrb[0].mxu0
    %v1811 = vadd.f32 %v1750, %v1810
    %v1812 = vpop.f32.mrb[0].mxu0
    %v1813 = vpop.f32.mrb[0].mxu0
    %v1814 = vadd.f32 %v1750, %v1813
    %v1815 = vpop.f32.mrb[0].mxu0
    %1816 = vmatprep.mubr.bf16.mxu0 0
    %1817 = vmatmul.mubr.bf16.gmra.mrb[0].mxu0 %v1774
    %v1818 = vpop.f32.mrb[0].mxu0
    %v1819 = vadd.f32 %v1750, %v1818
    %v1820 = vpop.f32.mrb[0].mxu0
    %v1821 = vpop.f32.mrb[0].mxu0
    %v1822 = vadd.f32 %v1750, %v1821
    %v1823 = vpop.f32.mrb[0].mxu0
    %1824 = vdwg.mxu0
    %v1825 = vadd.f32 %v1521, %v1811
    %v1826 = vadd.f32 %v1522, %v1814
    %v1827 = vadd.f32 %v1523, %v1819
    %v1828 = vadd.f32 %v1524, %v1822
    %v1829 = vadd.f32 %v1507, %v1811
    %v1830 = vadd.f32 %v1510, %v1814
    %v1831 = vadd.f32 %v1515, %v1819
    %v1832 = vadd.f32 %v1518, %v1822
    %s1833 = scalar_lea.vmem [#allocation9], 64
    %v1834 = vld [vmem:[%s1833] sm:$0xff]
    %v1835 = vld [vmem:[%s1833 + $0x8] sm:$0xff]
    %v1836 = vld [vmem:[%s1833 + $0x10] sm:$0xff]
    %v1837 = vld [vmem:[%s1833 + $0x18] sm:$0xff]
    %v1838 = vpack.c.bf16 %v1826, %v1825
    %v1839 = vpack.c.bf16 %v1828, %v1827
    %v1844 = vunpack.c.l.b16 %v1834
    %v1845 = vunpack.c.h.b16 %v1834
    %v1846 = vunpack.c.l.b16 %v1835
    %v1847 = vunpack.c.h.b16 %v1835
    %v1848 = vunpack.c.l.b16 %v1836
    %v1849 = vunpack.c.h.b16 %v1836
    %v1850 = vunpack.c.l.b16 %v1837
    %v1851 = vunpack.c.h.b16 %v1837
    %v1852 = vpack.c.b16 %v1846, %v1844
    %v1853 = vpack.c.b16 %v1847, %v1845
    %v1854 = vpack.c.b16 %v1850, %v1848
    %v1855 = vpack.c.b16 %v1851, %v1849
    %v1861 = vsel %vm341, %v1838, 0
    %v1864 = vsel %vm341, %v1839, 0
    %1866 = vmatprep.subr.bf16.mxu0 %v1853
    %1867 = vmatpush1.bf16.msra.mxu0 %v1852
    %1868 = vmatprep.subr.bf16.mxu0 %v1855
    %1869 = vmatpush1.bf16.msra.mxu0 %v1854
    %1870 = vmatprep.subr.bf16.mxu0 0
    %1871 = vmatpush1.bf16.msra.mxu0 0
    %1872 = vmatprep.subr.bf16.mxu0 0
    %1873 = vmatpush1.bf16.msra.mxu0 0
    %1874 = vmatprep.subr.bf16.mxu0 0
    %1875 = vmatpush1.bf16.msra.mxu0 0
    %1876 = vmatprep.subr.bf16.mxu0 0
    %1877 = vmatpush1.bf16.msra.mxu0 0
    %1878 = vmatprep.subr.bf16.mxu0 0
    %1879 = vmatpush1.bf16.msra.mxu0 0
    %1880 = vmatprep.subr.bf16.mxu0 0
    %1881 = vmatpush1.bf16.msra.mxu0 0
    %1882 = vmatprep.subr.bf16.mxu0 0
    %1883 = vmatpush1.bf16.msra.mxu0 0
    %1884 = vmatprep.subr.bf16.mxu0 0
    %1885 = vmatpush1.bf16.msra.mxu0 0
    %1886 = vmatprep.subr.bf16.mxu0 0
    %1887 = vmatpush1.bf16.msra.mxu0 0
    %1888 = vmatprep.subr.bf16.mxu0 0
    %1889 = vmatpush1.bf16.msra.mxu0 0
    %1890 = vmatprep.subr.bf16.mxu0 0
    %1891 = vmatpush1.bf16.msra.mxu0 0
    %1892 = vmatprep.subr.bf16.mxu0 0
    %1893 = vmatpush1.bf16.msra.mxu0 0
    %1894 = vmatprep.subr.bf16.mxu0 0
    %1895 = vmatpush1.bf16.msra.mxu0 0
    %1896 = vmatprep.subr.bf16.mxu0 0
    %1897 = vmatpush1.bf16.msra.mxu0 0
    %1898 = vmatprep.mubr.bf16.mxu0 0
    %1899 = vmatmul.mubr.bf16.gmra.mrb[0].mxu0 %v1861
    %v1900 = vpop.f32.mrb[0].mxu0
    %v1901 = vadd.f32 0.0, %v1900
    %v1902 = vpop.f32.mrb[0].mxu0
    %v1903 = vadd.f32 0.0, %v1902
    %v1904 = vpop.f32.mrb[0].mxu0
    %v1905 = vadd.f32 0.0, %v1904
    %v1906 = vpop.f32.mrb[0].mxu0
    %v1907 = vadd.f32 0.0, %v1906
    %1908 = vmatprep.mubr.bf16.mxu0 0
    %1909 = vmatmul.mubr.bf16.gmra.mrb[0].mxu0 %v1864
    %v1910 = vpop.f32.mrb[0].mxu0
    %v1911 = vadd.f32 0.0, %v1910
    %v1912 = vpop.f32.mrb[0].mxu0
    %v1913 = vadd.f32 0.0, %v1912
    %v1914 = vpop.f32.mrb[0].mxu0
    %v1915 = vadd.f32 0.0, %v1914
    %v1916 = vpop.f32.mrb[0].mxu0
    %v1917 = vadd.f32 0.0, %v1916
    %1918 = vdwg.mxu0
    %v1919 = vrot.slane %v1901, 4
    %v1920 = vrot.slane %v1905, 4
    %v1921 = vrot.slane %v1911, 4
    %v1922 = vrot.slane %v1915, 4
    %v1923 = vsel %vm1018, %v1921, %v1922
    %v1924 = vsel %vm1018, %v1920, %v1921
    %v1925 = vsel %vm1018, %v1919, %v1920
    %v1926 = vsel %vm1018, %v1922, %v1919
    %v1927 = vrot.slane %v1903, 4
    %v1928 = vrot.slane %v1907, 4
    %v1929 = vrot.slane %v1913, 4
    %v1930 = vrot.slane %v1917, 4
    %v1931 = vsel %vm1018, %v1929, %v1930
    %v1932 = vsel %vm1018, %v1928, %v1929
    %v1933 = vsel %vm1018, %v1927, %v1928
    %v1934 = vsel %vm1018, %v1930, %v1927
    %v1935 = vsel %vm237, %v1926, 0.0
    %v1936 = vsel %vm238, %v1925, 0.0
    %v1937 = vsel %vm239, %v1924, 0.0
    %v1938 = vsel %vm240, %v1923, 0.0
    %1943 = vrot.lane.b32.xlu0 %v1935, 64
    %v1944 = vpop.permute.xlu0 %1943
    %1945 = vrot.lane.b32.xlu0 %v1936, 64
    %v1946 = vpop.permute.xlu0 %1945
    %1947 = vrot.lane.b32.xlu0 %v1937, 64
    %v1948 = vpop.permute.xlu0 %1947
    %1949 = vrot.lane.b32.xlu0 %v1938, 64
    %v1950 = vpop.permute.xlu0 %1949
    %v1955 = vadd.f32 %v1901, %v1944
    %v1956 = vadd.f32 %v1905, %v1946
    %v1957 = vadd.f32 %v1911, %v1948
    %v1958 = vadd.f32 %v1915, %v1950
    %v1959 = vsel %vm241, %v1933, 0.0
    %v1960 = vsel %vm242, %v1932, 0.0
    %v1961 = vsel %vm243, %v1931, 0.0
    %v1962 = vsel %vm244, %v1934, 0.0
    %1967 = vrot.lane.b32.xlu0 %v1959, 64
    %v1968 = vpop.permute.xlu0 %1967
    %1969 = vrot.lane.b32.xlu0 %v1960, 64
    %v1970 = vpop.permute.xlu0 %1969
    %1971 = vrot.lane.b32.xlu0 %v1961, 64
    %v1972 = vpop.permute.xlu0 %1971
    %1973 = vrot.lane.b32.xlu0 %v1962, 64
    %v1974 = vpop.permute.xlu0 %1973
    %v1979 = vadd.f32 %v1955, %v1968
    %v1980 = vadd.f32 %v1956, %v1970
    %v1981 = vadd.f32 %v1957, %v1972
    %v1982 = vadd.f32 %v1958, %v1974
    %s1983 = scalar_lea.vmem [#allocation10], 2
    %v1984 = vld [vmem:[%s1983] sm:$0x1]
    %v1986 = vlaneseq
    %v1987 = vshrl.u32 %v1986, 7
    %v1988 = vsub.s32 0, %v1987
    %v1989 = vrot.slane %v1984, %v1988
    %1990 = vrot.lane.b32.xlu0 %v1989, 64
    %v1991 = vpop.permute.xlu0 %1990
    %v1993 = vadd.f32 %v1979, %v1991
    %v1994 = vadd.f32 %v1980, %v1991
    %v1995 = vadd.f32 %v1981, %v1991
    %v1996 = vadd.f32 %v1982, %v1991
    %v1997 = vtanh.pop %v1993
    %v1998 = vtanh.pop %v1994
    %v1999 = vtanh.pop %v1995
    %v2000 = vtanh.pop %v1996
    %v2001 = vxor.u32 %v1993, 2147483648
    %v2002 = vxor.u32 %v1994, 2147483648
    %v2003 = vxor.u32 %v1995, 2147483648
    %v2004 = vxor.u32 %v1996, 2147483648
    %v2005 = vmul.f32 %v2001, 1.442695
    %v2006 = vpow.pop %v2005
    %v2007 = vmul.f32 %v2002, 1.442695
    %v2008 = vpow.pop %v2007
    %v2009 = vmul.f32 %v2003, 1.442695
    %v2010 = vpow.pop %v2009
    %v2011 = vmul.f32 %v2004, 1.442695
    %v2012 = vpow.pop %v2011
    %v2013 = vadd.f32 %v2006, 1.0
    %v2014 = vadd.f32 %v2008, 1.0
    %v2015 = vadd.f32 %v2010, 1.0
    %v2016 = vadd.f32 %v2012, 1.0
    %v2017 = vrcp.pop %v2013
    %v2018 = vmul.f32 1.0, %v2017
    %v2019 = vrcp.pop %v2014
    %v2020 = vmul.f32 1.0, %v2019
    %v2021 = vrcp.pop %v2015
    %v2022 = vmul.f32 1.0, %v2021
    %v2023 = vrcp.pop %v2016
    %v2024 = vmul.f32 1.0, %v2023
    %2029 = vrot.lane.b32.xlu0 %v2018, 96
    %v2030 = vpop.permute.xlu0 %2029
    %2031 = vrot.lane.b32.xlu0 %v2020, 96
    %v2032 = vpop.permute.xlu0 %2031
    %2033 = vrot.lane.b32.xlu0 %v2022, 96
    %v2034 = vpop.permute.xlu0 %2033
    %2035 = vrot.lane.b32.xlu0 %v2024, 96
    %v2036 = vpop.permute.xlu0 %2035
    %v2041 = vmul.f32 %v1997, %v2030
    %v2042 = vmul.f32 %v1998, %v2032
    %v2043 = vmul.f32 %v1999, %v2034
    %v2044 = vmul.f32 %v2000, %v2036
    %s2045 = scalar_lea.vmem [#allocation12], 32
    %v2046 = vld [vmem:[%s2045] sm:$0xf]
    %v2047 = vld [vmem:[%s2045 + $0x4] sm:$0xf]
    %v2048 = vld [vmem:[%s2045 + $0x8] sm:$0xf]
    %v2049 = vld [vmem:[%s2045 + $0xc] sm:$0xf]
    %v2050 = vpack.c.bf16 %v2042, %v2041
    %v2051 = vpack.c.bf16 %v2044, %v2043
    %s2052 = scalar_lea.vmem [#allocation13], 2
    %v2053 = vld [vmem:[%s2052] sm:$0x1]
    %v2055 = vlaneseq
    %v2056 = vshrl.u32 %v2055, 7
    %v2057 = vsub.s32 0, %v2056
    %v2058 = vrot.slane %v2053, %v2057
    %2062 = vrot.lane.b32.xlu0 %v2050, 64
    %v2063 = vpop.permute.xlu0 %2062
    %2064 = vrot.lane.b32.xlu0 %v2051, 64
    %v2065 = vpop.permute.xlu0 %2064
    %v2070 = vunpack.c.l.b16 %v2046
    %v2071 = vunpack.c.l.b16 %v2047
    %v2072 = vunpack.c.l.b16 %v2048
    %v2073 = vunpack.c.l.b16 %v2049
    %v2074 = vpack.c.b16 %v2071, %v2070
    %v2075 = vpack.c.b16 %v2073, %v2072
    %v2079 = vsel %vm341, %v2063, 0
    %v2082 = vsel %vm341, %v2065, 0
    %2084 = vmatprep.subr.bf16.mxu0 0
    %2085 = vmatpush1.bf16.msra.mxu0 %v2074
    %2086 = vmatprep.subr.bf16.mxu0 0
    %2087 = vmatpush1.bf16.msra.mxu0 %v2075
    %2088 = vmatprep.subr.bf16.mxu0 0
    %2089 = vmatpush1.bf16.msra.mxu0 0
    %2090 = vmatprep.subr.bf16.mxu0 0
    %2091 = vmatpush1.bf16.msra.mxu0 0
    %2092 = vmatprep.subr.bf16.mxu0 0
    %2093 = vmatpush1.bf16.msra.mxu0 0
    %2094 = vmatprep.subr.bf16.mxu0 0
    %2095 = vmatpush1.bf16.msra.mxu0 0
    %2096 = vmatprep.subr.bf16.mxu0 0
    %2097 = vmatpush1.bf16.msra.mxu0 0
    %2098 = vmatprep.subr.bf16.mxu0 0
    %2099 = vmatpush1.bf16.msra.mxu0 0
    %2100 = vmatprep.subr.bf16.mxu0 0
    %2101 = vmatpush1.bf16.msra.mxu0 0
    %2102 = vmatprep.subr.bf16.mxu0 0
    %2103 = vmatpush1.bf16.msra.mxu0 0
    %2104 = vmatprep.subr.bf16.mxu0 0
    %2105 = vmatpush1.bf16.msra.mxu0 0
    %2106 = vmatprep.subr.bf16.mxu0 0
    %2107 = vmatpush1.bf16.msra.mxu0 0
    %2108 = vmatprep.subr.bf16.mxu0 0
    %2109 = vmatpush1.bf16.msra.mxu0 0
    %2110 = vmatprep.subr.bf16.mxu0 0
    %2111 = vmatpush1.bf16.msra.mxu0 0
    %2112 = vmatprep.subr.bf16.mxu0 0
    %2113 = vmatpush1.bf16.msra.mxu0 0
    %2114 = vmatprep.subr.bf16.mxu0 0
    %2115 = vmatpush1.bf16.msra.mxu0 0
    %2116 = vmatprep.mubr.bf16.mxu0 0
    %2117 = vmatmul.mubr.bf16.gmra.mrb[0].mxu0 %v2079
    %v2118 = vpop.f32.mrb[0].mxu0
    %v2119 = vadd.f32 %v2058, %v2118
    %v2120 = vpop.f32.mrb[0].mxu0
    %v2121 = vpop.f32.mrb[0].mxu0
    %v2122 = vadd.f32 %v2058, %v2121
    %v2123 = vpop.f32.mrb[0].mxu0
    %2124 = vmatprep.mubr.bf16.mxu0 0
    %2125 = vmatmul.mubr.bf16.gmra.mrb[0].mxu0 %v2082
    %v2126 = vpop.f32.mrb[0].mxu0
    %v2127 = vadd.f32 %v2058, %v2126
    %v2128 = vpop.f32.mrb[0].mxu0
    %v2129 = vpop.f32.mrb[0].mxu0
    %v2130 = vadd.f32 %v2058, %v2129
    %v2131 = vpop.f32.mrb[0].mxu0
    %2132 = vdwg.mxu0
    %v2133 = vadd.f32 %v1829, %v2119
    %v2134 = vadd.f32 %v1830, %v2122
    %v2135 = vadd.f32 %v1831, %v2127
    %v2136 = vadd.f32 %v1832, %v2130
    %v2137 = vld [vmem:[%s11] sm:$0xf]
    %v2138 = vld [vmem:[%s11 + $0x4] sm:$0xf]
    %v2139 = vld [vmem:[%s11 + $0x8] sm:$0xf]
    %v2140 = vld [vmem:[%s11 + $0xc] sm:$0xf]
    %v2141 = vpack.c.bf16 %v1230, %v1229
    %v2142 = vpack.c.bf16 %v1232, %v1231
    %v2143 = vld [vmem:[%s12] sm:$0x1]
    %v2145 = vlaneseq
    %v2146 = vshrl.u32 %v2145, 7
    %v2147 = vsub.s32 0, %v2146
    %v2148 = vrot.slane %v2143, %v2147
    %2152 = vrot.lane.b32.xlu0 %v2141, 96
    %v2153 = vpop.permute.xlu0 %2152
    %2154 = vrot.lane.b32.xlu0 %v2142, 96
    %v2155 = vpop.permute.xlu0 %2154
    %v2160 = vunpack.c.l.b16 %v2137
    %v2161 = vunpack.c.l.b16 %v2138
    %v2162 = vunpack.c.l.b16 %v2139
    %v2163 = vunpack.c.l.b16 %v2140
    %v2164 = vpack.c.b16 %v2161, %v2160
    %v2165 = vpack.c.b16 %v2163, %v2162
    %v2169 = vsel %vm341, %v2153, 0
    %v2172 = vsel %vm341, %v2155, 0
    %2174 = vmatprep.subr.bf16.mxu0 0
    %2175 = vmatpush1.bf16.msra.mxu0 %v2164
    %2176 = vmatprep.subr.bf16.mxu0 0
    %2177 = vmatpush1.bf16.msra.mxu0 %v2165
    %2178 = vmatprep.subr.bf16.mxu0 0
    %2179 = vmatpush1.bf16.msra.mxu0 0
    %2180 = vmatprep.subr.bf16.mxu0 0
    %2181 = vmatpush1.bf16.msra.mxu0 0
    %2182 = vmatprep.subr.bf16.mxu0 0
    %2183 = vmatpush1.bf16.msra.mxu0 0
    %2184 = vmatprep.subr.bf16.mxu0 0
    %2185 = vmatpush1.bf16.msra.mxu0 0
    %2186 = vmatprep.subr.bf16.mxu0 0
    %2187 = vmatpush1.bf16.msra.mxu0 0
    %2188 = vmatprep.subr.bf16.mxu0 0
    %2189 = vmatpush1.bf16.msra.mxu0 0
    %2190 = vmatprep.subr.bf16.mxu0 0
    %2191 = vmatpush1.bf16.msra.mxu0 0
    %2192 = vmatprep.subr.bf16.mxu0 0
    %2193 = vmatpush1.bf16.msra.mxu0 0
    %2194 = vmatprep.subr.bf16.mxu0 0
    %2195 = vmatpush1.bf16.msra.mxu0 0
    %2196 = vmatprep.subr.bf16.mxu0 0
    %2197 = vmatpush1.bf16.msra.mxu0 0
    %2198 = vmatprep.subr.bf16.mxu0 0
    %2199 = vmatpush1.bf16.msra.mxu0 0
    %2200 = vmatprep.subr.bf16.mxu0 0
    %2201 = vmatpush1.bf16.msra.mxu0 0
    %2202 = vmatprep.subr.bf16.mxu0 0
    %2203 = vmatpush1.bf16.msra.mxu0 0
    %2204 = vmatprep.subr.bf16.mxu0 0
    %2205 = vmatpush1.bf16.msra.mxu0 0
    %2206 = vmatprep.mubr.bf16.mxu0 0
    %2207 = vmatmul.mubr.bf16.gmra.mrb[0].mxu0 %v2169
    %v2208 = vpop.f32.mrb[0].mxu0
    %v2209 = vadd.f32 %v2148, %v2208
    %v2210 = vpop.f32.mrb[0].mxu0
    %v2211 = vpop.f32.mrb[0].mxu0
    %v2212 = vadd.f32 %v2148, %v2211
    %v2213 = vpop.f32.mrb[0].mxu0
    %2214 = vmatprep.mubr.bf16.mxu0 0
    %2215 = vmatmul.mubr.bf16.gmra.mrb[0].mxu0 %v2172
    %v2216 = vpop.f32.mrb[0].mxu0
    %v2217 = vadd.f32 %v2148, %v2216
    %v2218 = vpop.f32.mrb[0].mxu0
    %v2219 = vpop.f32.mrb[0].mxu0
    %v2220 = vadd.f32 %v2148, %v2219
    %v2221 = vpop.f32.mrb[0].mxu0
    %2222 = vdwg.mxu0
    %v2223 = vld [vmem:[%s13] sm:$0xf]
    %v2224 = vld [vmem:[%s13 + $0x4] sm:$0xf]
    %v2225 = vld [vmem:[%s13 + $0x8] sm:$0xf]
    %v2226 = vld [vmem:[%s13 + $0xc] sm:$0xf]
    %v2227 = vpack.c.bf16 %v2134, %v2133
    %v2228 = vpack.c.bf16 %v2136, %v2135
    %v2229 = vld [vmem:[%s14] sm:$0x1]
    %v2231 = vlaneseq
    %v2232 = vshrl.u32 %v2231, 7
    %v2233 = vsub.s32 0, %v2232
    %v2234 = vrot.slane %v2229, %v2233
    %2238 = vrot.lane.b32.xlu0 %v2227, 96
    %v2239 = vpop.permute.xlu0 %2238
    %2240 = vrot.lane.b32.xlu0 %v2228, 96
    %v2241 = vpop.permute.xlu0 %2240
    %v2246 = vunpack.c.l.b16 %v2223
    %v2247 = vunpack.c.l.b16 %v2224
    %v2248 = vunpack.c.l.b16 %v2225
    %v2249 = vunpack.c.l.b16 %v2226
    %v2250 = vpack.c.b16 %v2247, %v2246
    %v2251 = vpack.c.b16 %v2249, %v2248
    %v2255 = vsel %vm341, %v2239, 0
    %v2258 = vsel %vm341, %v2241, 0
    %2260 = vmatprep.subr.bf16.mxu0 0
    %2261 = vmatpush1.bf16.msra.mxu0 %v2250
    %2262 = vmatprep.subr.bf16.mxu0 0
    %2263 = vmatpush1.bf16.msra.mxu0 %v2251
    %2264 = vmatprep.subr.bf16.mxu0 0
    %2265 = vmatpush1.bf16.msra.mxu0 0
    %2266 = vmatprep.subr.bf16.mxu0 0
    %2267 = vmatpush1.bf16.msra.mxu0 0
    %2268 = vmatprep.subr.bf16.mxu0 0
    %2269 = vmatpush1.bf16.msra.mxu0 0
    %2270 = vmatprep.subr.bf16.mxu0 0
    %2271 = vmatpush1.bf16.msra.mxu0 0
    %2272 = vmatprep.subr.bf16.mxu0 0
    %2273 = vmatpush1.bf16.msra.mxu0 0
    %2274 = vmatprep.subr.bf16.mxu0 0
    %2275 = vmatpush1.bf16.msra.mxu0 0
    %2276 = vmatprep.subr.bf16.mxu0 0
    %2277 = vmatpush1.bf16.msra.mxu0 0
    %2278 = vmatprep.subr.bf16.mxu0 0
    %2279 = vmatpush1.bf16.msra.mxu0 0
    %2280 = vmatprep.subr.bf16.mxu0 0
    %2281 = vmatpush1.bf16.msra.mxu0 0
    %2282 = vmatprep.subr.bf16.mxu0 0
    %2283 = vmatpush1.bf16.msra.mxu0 0
    %2284 = vmatprep.subr.bf16.mxu0 0
    %2285 = vmatpush1.bf16.msra.mxu0 0
    %2286 = vmatprep.subr.bf16.mxu0 0
    %2287 = vmatpush1.bf16.msra.mxu0 0
    %2288 = vmatprep.subr.bf16.mxu0 0
    %2289 = vmatpush1.bf16.msra.mxu0 0
    %2290 = vmatprep.subr.bf16.mxu0 0
    %2291 = vmatpush1.bf16.msra.mxu0 0
    %2292 = vmatprep.mubr.bf16.mxu0 0
    %2293 = vmatmul.mubr.bf16.gmra.mrb[0].mxu0 %v2255
    %v2294 = vpop.f32.mrb[0].mxu0
    %v2295 = vadd.f32 %v2234, %v2294
    %v2296 = vpop.f32.mrb[0].mxu0
    %v2297 = vpop.f32.mrb[0].mxu0
    %v2298 = vadd.f32 %v2234, %v2297
    %v2299 = vpop.f32.mrb[0].mxu0
    %2300 = vmatprep.mubr.bf16.mxu0 0
    %2301 = vmatmul.mubr.bf16.gmra.mrb[0].mxu0 %v2258
    %v2302 = vpop.f32.mrb[0].mxu0
    %v2303 = vadd.f32 %v2234, %v2302
    %v2304 = vpop.f32.mrb[0].mxu0
    %v2305 = vpop.f32.mrb[0].mxu0
    %v2306 = vadd.f32 %v2234, %v2305
    %v2307 = vpop.f32.mrb[0].mxu0
    %2308 = vdwg.mxu0
    %v2309 = vld [vmem:[%s15] sm:$0xf]
    %v2310 = vld [vmem:[%s15 + $0x4] sm:$0xf]
    %v2311 = vld [vmem:[%s15 + $0x8] sm:$0xf]
    %v2312 = vld [vmem:[%s15 + $0xc] sm:$0xf]
    %v2313 = vpack.c.bf16 %v2212, %v2209
    %v2314 = vpack.c.bf16 %v2220, %v2217
    %v2319 = vunpack.c.l.b16 %v2309
    %v2320 = vunpack.c.l.b16 %v2310
    %v2321 = vunpack.c.l.b16 %v2311
    %v2322 = vunpack.c.l.b16 %v2312
    %v2323 = vpack.c.b16 %v2320, %v2319
    %v2324 = vpack.c.b16 %v2322, %v2321
    %v2326 = vsel %vm341, %v2323, 0
    %v2329 = vsel %vm341, %v2324, 0
    %2331 = vmatprep.subr.bf16.mxu0 0
    %2332 = vmatpush1.bf16.msra.mxu0 %v2313
    %2333 = vmatprep.subr.bf16.mxu0 0
    %2334 = vmatpush1.bf16.msra.mxu0 %v2314
    %2335 = vmatprep.subr.bf16.mxu0 0
    %2336 = vmatpush1.bf16.msra.mxu0 0
    %2337 = vmatprep.subr.bf16.mxu0 0
    %2338 = vmatpush1.bf16.msra.mxu0 0
    %2339 = vmatprep.subr.bf16.mxu0 0
    %2340 = vmatpush1.bf16.msra.mxu0 0
    %2341 = vmatprep.subr.bf16.mxu0 0
    %2342 = vmatpush1.bf16.msra.mxu0 0
    %2343 = vmatprep.subr.bf16.mxu0 0
    %2344 = vmatpush1.bf16.msra.mxu0 0
    %2345 = vmatprep.subr.bf16.mxu0 0
    %2346 = vmatpush1.bf16.msra.mxu0 0
    %2347 = vmatprep.subr.bf16.mxu0 0
    %2348 = vmatpush1.bf16.msra.mxu0 0
    %2349 = vmatprep.subr.bf16.mxu0 0
    %2350 = vmatpush1.bf16.msra.mxu0 0
    %2351 = vmatprep.subr.bf16.mxu0 0
    %2352 = vmatpush1.bf16.msra.mxu0 0
    %2353 = vmatprep.subr.bf16.mxu0 0
    %2354 = vmatpush1.bf16.msra.mxu0 0
    %2355 = vmatprep.subr.bf16.mxu0 0
    %2356 = vmatpush1.bf16.msra.mxu0 0
    %2357 = vmatprep.subr.bf16.mxu0 0
    %2358 = vmatpush1.bf16.msra.mxu0 0
    %2359 = vmatprep.subr.bf16.mxu0 0
    %2360 = vmatpush1.bf16.msra.mxu0 0
    %2361 = vmatprep.subr.bf16.mxu0 0
    %2362 = vmatpush1.bf16.msra.mxu0 0
    %2363 = vmatprep.mubr.bf16.mxu0 0
    %2364 = vmatmul.mubr.bf16.gmra.mrb[0].mxu0 %v2326
    %v2365 = vpop.f32.mrb[0].mxu0
    %v2366 = vadd.f32 0.0, %v2365
    %v2367 = vpop.f32.mrb[0].mxu0
    %v2368 = vpop.f32.mrb[0].mxu0
    %v2369 = vadd.f32 0.0, %v2368
    %v2370 = vpop.f32.mrb[0].mxu0
    %2371 = vmatprep.mubr.bf16.mxu0 0
    %2372 = vmatmul.mubr.bf16.gmra.mrb[0].mxu0 %v2329
    %v2373 = vpop.f32.mrb[0].mxu0
    %v2374 = vadd.f32 0.0, %v2373
    %v2375 = vpop.f32.mrb[0].mxu0
    %v2376 = vpop.f32.mrb[0].mxu0
    %v2377 = vadd.f32 0.0, %v2376
    %v2378 = vpop.f32.mrb[0].mxu0
    %2379 = vdwg.mxu0
    %v2380 = vadd.f32 %v164, %v2366
    %v2381 = vadd.f32 %v165, %v2369
    %v2382 = vadd.f32 %v166, %v2374
    %v2383 = vadd.f32 %v167, %v2377
    %v2384 = vld [vmem:[%s16] sm:$0xf]
    %v2385 = vld [vmem:[%s16 + $0x4] sm:$0xf]
    %v2386 = vld [vmem:[%s16 + $0x8] sm:$0xf]
    %v2387 = vld [vmem:[%s16 + $0xc] sm:$0xf]
    %v2388 = vpack.c.bf16 %v2298, %v2295
    %v2389 = vpack.c.bf16 %v2306, %v2303
    %v2394 = vunpack.c.l.b16 %v2384
    %v2395 = vunpack.c.l.b16 %v2385
    %v2396 = vunpack.c.l.b16 %v2386
    %v2397 = vunpack.c.l.b16 %v2387
    %v2398 = vpack.c.b16 %v2395, %v2394
    %v2399 = vpack.c.b16 %v2397, %v2396
    %v2401 = vsel %vm341, %v2398, 0
    %v2404 = vsel %vm341, %v2399, 0
    %2406 = vmatprep.subr.bf16.mxu0 0
    %2407 = vmatpush1.bf16.msra.mxu0 %v2388
    %2408 = vmatprep.subr.bf16.mxu0 0
    %2409 = vmatpush1.bf16.msra.mxu0 %v2389
    %2410 = vmatprep.subr.bf16.mxu0 0
    %2411 = vmatpush1.bf16.msra.mxu0 0
    %2412 = vmatprep.subr.bf16.mxu0 0
    %2413 = vmatpush1.bf16.msra.mxu0 0
    %2414 = vmatprep.subr.bf16.mxu0 0
    %2415 = vmatpush1.bf16.msra.mxu0 0
    %2416 = vmatprep.subr.bf16.mxu0 0
    %2417 = vmatpush1.bf16.msra.mxu0 0
    %2418 = vmatprep.subr.bf16.mxu0 0
    %2419 = vmatpush1.bf16.msra.mxu0 0
    %2420 = vmatprep.subr.bf16.mxu0 0
    %2421 = vmatpush1.bf16.msra.mxu0 0
    %2422 = vmatprep.subr.bf16.mxu0 0
    %2423 = vmatpush1.bf16.msra.mxu0 0
    %2424 = vmatprep.subr.bf16.mxu0 0
    %2425 = vmatpush1.bf16.msra.mxu0 0
    %2426 = vmatprep.subr.bf16.mxu0 0
    %2427 = vmatpush1.bf16.msra.mxu0 0
    %2428 = vmatprep.subr.bf16.mxu0 0
    %2429 = vmatpush1.bf16.msra.mxu0 0
    %2430 = vmatprep.subr.bf16.mxu0 0
    %2431 = vmatpush1.bf16.msra.mxu0 0
    %2432 = vmatprep.subr.bf16.mxu0 0
    %2433 = vmatpush1.bf16.msra.mxu0 0
    %2434 = vmatprep.subr.bf16.mxu0 0
    %2435 = vmatpush1.bf16.msra.mxu0 0
    %2436 = vmatprep.subr.bf16.mxu0 0
    %2437 = vmatpush1.bf16.msra.mxu0 0
    %2438 = vmatprep.mubr.bf16.mxu0 0
    %2439 = vmatmul.mubr.bf16.gmra.mrb[0].mxu0 %v2401
    %v2440 = vpop.f32.mrb[0].mxu0
    %v2441 = vadd.f32 0.0, %v2440
    %v2442 = vpop.f32.mrb[0].mxu0
    %v2443 = vpop.f32.mrb[0].mxu0
    %v2444 = vadd.f32 0.0, %v2443
    %v2445 = vpop.f32.mrb[0].mxu0
    %2446 = vmatprep.mubr.bf16.mxu0 0
    %2447 = vmatmul.mubr.bf16.gmra.mrb[0].mxu0 %v2404
    %v2448 = vpop.f32.mrb[0].mxu0
    %v2449 = vadd.f32 0.0, %v2448
    %v2450 = vpop.f32.mrb[0].mxu0
    %v2451 = vpop.f32.mrb[0].mxu0
    %v2452 = vadd.f32 0.0, %v2451
    %v2453 = vpop.f32.mrb[0].mxu0
    %2454 = vdwg.mxu0
    %v2455 = vadd.f32 %v2380, %v2441
    %v2456 = vadd.f32 %v2381, %v2444
    %v2457 = vadd.f32 %v2382, %v2449
    %v2458 = vadd.f32 %v2383, %v2452
    %vm2459 = vcmask 64512
    %2460 = vst.msk [vmem:[%s17] sm:$0xff] %vm2459, %v2455
    %2461 = vst.msk [vmem:[%s17 + $0x8] sm:$0xff] %vm2459, %v2456
    %2462 = vst.msk [vmem:[%s17 + $0x10] sm:$0xff] %vm2459, %v2457
    %2463 = vst.msk [vmem:[%s17 + $0x18] sm:$0xff] %vm2459, %v2458
    // Predicated region
    $region102: #{hierarchy_flow_forward.1} parent=1 // pred_check
      _
    $region103: #{hierarchy_flow_forward.1} parent=1 // pred_check_branch
      %2465 = sbr.rel (0) target = $region105
    $region104: #{hierarchy_flow_forward.1} parent=1 // pred_region
      _
    $region105: #{hierarchy_flow_forward.1} parent=1 // pred_fallthru
      _
    // Predicated region
    $region106: #{hierarchy_flow_forward.1} parent=1 // pred_check
      _
    $region107: #{hierarchy_flow_forward.1} parent=1 // pred_check_branch
      %2467 = sbr.rel (0) target = $region109
    $region108: #{hierarchy_flow_forward.1} parent=1 // pred_region
      _
    $region109: #{hierarchy_flow_forward.1} parent=1 // pred_fallthru
      _
    %2468 = vsyncpa [#allocation3], 1
    %2469 = vsyncpa [#allocation5], 1
    %2470 = vsyncpa [#allocation8], 1
    %2471 = vsyncpa [#allocation11], 1
    %2472 = vsyncpa [#allocation14], 1

</llo_original>
